<compile_context>
chip_gen: v6e
topology: v6e:2x2x1
jax: 0.10.0
libtpu: 0.0.40
codegen_flags: <defaults>
</compile_context>

<pallas_src>
import functools

import jax
import jax.numpy as jnp
from jax.experimental import pallas as pl
from jax.experimental.pallas import tpu as pltpu

EPS = 1e-5


def _round_up(a, b):
    return (a + b - 1) // b * b


def mlp_kernel(
    alpha_ref,                          # SMEM (3,) f32 (scalar prefetch)
    x_ref,                              # (tm, in_p)  matmul dtype
    w1_ref, w2_ref, w3_ref, ws_ref,     # resident weights, matmul dtype
    pvec_ref,                           # (16, out_p) f32 packed per-feature vectors
    o_ref,                              # (tm, out_p) out dtype
    *,
    out_ft,
    chunk,
):
    tm = x_ref.shape[0]
    out_p = o_ref.shape[-1]
    extra = out_p - out_ft              # number of zero-padded feature lanes
    inv_n = 1.0 / out_ft

    # Packed per-feature vectors: one block, static row slices.
    pv = pvec_ref[...]
    b1, g1, be1 = pv[0:1], pv[1:2], pv[2:3]
    b2, g2, be2 = pv[3:4], pv[4:5], pv[5:6]
    b3, g3, be3 = pv[6:7], pv[7:8], pv[8:9]
    bs = pv[9:10]

    w1 = w1_ref[...]
    w2 = w2_ref[...]
    w3 = w3_ref[...]
    ws = ws_ref[...]

    a1 = alpha_ref[0]
    a2 = alpha_ref[1]
    a3 = alpha_ref[2]

    def layernorm_prelu(h, gamma, beta, alpha):
        # Padded lanes of h are exactly zero (zero-padded weights/biases), so
        # sum(h) over all lanes equals the sum over the real out_ft lanes.
        # The centered term adds (out_p - out_ft) * mean^2 to sum(c*c);
        # subtract it exactly instead of masking (saves a (chunk, out_p) VPU
        # multiply per LayerNorm).
        mean = jnp.sum(h, axis=-1, keepdims=True) * inv_n
        c = h - mean
        ssq = jnp.sum(c * c, axis=-1, keepdims=True)
        if extra:
            ssq = ssq - extra * (mean * mean)
        y = c * jax.lax.rsqrt(ssq * inv_n + EPS) * gamma + beta
        # gamma/beta are zero on padded lanes -> padded lanes of y stay 0.
        return jnp.where(y >= 0, y, alpha * y)

    mm = lambda a, b: jnp.dot(a, b, preferred_element_type=jnp.float32)
    cast = lambda a: a.astype(w2.dtype)     # back to MXU dtype between layers

    # Sub-tile the rows: independent chunks let the scheduler interleave the
    # MXU matmuls of one chunk with the LayerNorm/PReLU of another and keep
    # the live f32 intermediates small.
    n_chunks = max(tm // chunk, 1)
    for ci in range(n_chunks):
        rows = pl.ds(ci * chunk, chunk)
        x = x_ref[rows, :]

        h = mm(x, w1) + b1
        h = layernorm_prelu(h, g1, be1, a1)
        h = mm(cast(h), w2) + b2
        h = layernorm_prelu(h, g2, be2, a2)
        h = mm(cast(h), w3) + b3
        h = layernorm_prelu(h, g3, be3, a3)
        sc = mm(x, ws) + bs

        o_ref[rows, :] = (h + sc).astype(o_ref.dtype)


def mlp_pallas(x, params, *, tm=256, chunk=128, matmul_dtype=jnp.bfloat16,
               out_dtype=jnp.float32, lane_multiple=128):
    N, in_ft = x.shape
    out_ft = params["w1"].shape[1]

    # --- wrapper-side layout plumbing ---------------------------------------
    # lane_multiple=256 packs the 2x256^2 MXU of v6e/v7x slightly better;
    # 128 is always correct and optimal for v5e.
    in_p = _round_up(in_ft, lane_multiple)
    out_p = _round_up(out_ft, lane_multiple)

    row_align = 16 if jnp.dtype(matmul_dtype).itemsize == 2 else 8
    # Clamp tm so the (parallel) row grid gets >= 2 steps whenever N allows it:
    # v7x shards this axis across its 2 TensorCores.
    max_tile = _round_up(max(-(-N // 2), row_align), row_align)
    tm = _round_up(min(tm, max_tile), row_align)
    n_p = _round_up(N, tm)
    grid = (n_p // tm,)

    # In-kernel row sub-tile: largest of {chunk,128,64,32,16} dividing tm.
    for cand in (chunk, 128, 64, 32, 16):
        if cand <= tm and tm % cand == 0:
            chunk = cand
            break
    else:
        chunk = tm

    def pad2(a, rows, cols):
        return jnp.pad(a, ((0, rows - a.shape[0]), (0, cols - a.shape[1])))

    x_p = pad2(x, n_p, in_p).astype(matmul_dtype)
    w1 = pad2(params["w1"], in_p, out_p).astype(matmul_dtype)
    w2 = pad2(params["w2"], out_p, out_p).astype(matmul_dtype)
    w3 = pad2(params["w3"], out_p, out_p).astype(matmul_dtype)
    ws = pad2(params["ws"], in_p, out_p).astype(matmul_dtype)

    # Pack the ten (1, out_ft) per-feature vectors into one (16, out_p) block.
    vec_order = ("b1", "g1", "be1", "b2", "g2", "be2", "b3", "g3", "be3", "bs")
    pvec = jnp.zeros((16, out_p), jnp.float32)
    for r, name in enumerate(vec_order):
        v = jnp.asarray(params[name], jnp.float32).reshape(1, -1)
        pvec = pvec.at[r, : v.shape[1]].set(v[0])

    alphas = jnp.stack(
        [jnp.asarray(params["a1"]).reshape(()),
         jnp.asarray(params["a2"]).reshape(()),
         jnp.asarray(params["a3"]).reshape(())]
    ).astype(jnp.float32)

    tensor_args = (x_p, w1, w2, w3, ws, pvec)

    # --- cost hint / VMEM budget ---------------------------------------------
    flops = 2 * n_p * (2 * in_p * out_p + 2 * out_p * out_p)
    bytes_accessed = (
        sum(a.size * a.dtype.itemsize for a in tensor_args)
        + n_p * out_p * jnp.dtype(out_dtype).itemsize
    )
    cost = pl.CostEstimate(
        flops=flops, transcendentals=3 * n_p, bytes_accessed=bytes_accessed
    )

    itemsize = jnp.dtype(matmul_dtype).itemsize
    weight_bytes = (2 * in_p * out_p + 2 * out_p * out_p) * itemsize
    vec_bytes = 16 * out_p * 4
    io_bytes = 2 * (tm * in_p * itemsize + tm * out_p * jnp.dtype(out_dtype).itemsize)
    interm_bytes = 8 * chunk * out_p * 4
    # Budget for the worst case (double-buffered invariants if Buffered(1) is
    # not honored) plus headroom.
    # TODO(synk): feature-tile out_p (or split into per-layer kernels) once the
    # resident weights no longer fit v7x's 64 MiB per-TC VMEM (out_ft >~ 2.5k).
    needed = 2 * (weight_bytes + vec_bytes) + io_bytes + interm_bytes
    vmem_limit = int(min(max(needed + (8 << 20), 32 << 20), 120 << 20))

    def run(single_buffer_invariants):
        row_in = pl.BlockSpec((tm, in_p), lambda i, alphas: (i, 0))
        row_out = pl.BlockSpec((tm, out_p), lambda i, alphas: (i, 0))

        def full(a):  # grid-invariant operand, resident for the whole call
            if single_buffer_invariants:
                return pl.BlockSpec(
                    a.shape, lambda i, alphas: (0, 0),
                    pipeline_mode=pl.Buffered(1),
                )
            return pl.BlockSpec(a.shape, lambda i, alphas: (0, 0))

        in_specs = [row_in] + [full(a) for a in tensor_args[1:]]

        out = pl.pallas_call(
            functools.partial(mlp_kernel, out_ft=out_ft, chunk=chunk),
            out_shape=jax.ShapeDtypeStruct((n_p, out_p), out_dtype),
            grid_spec=pltpu.PrefetchScalarGridSpec(
                num_scalar_prefetch=1,
                grid=grid,
                in_specs=in_specs,
                out_specs=row_out,
            ),
            compiler_params=pltpu.CompilerParams(
                dimension_semantics=("parallel",),
                vmem_limit_bytes=vmem_limit,
            ),
            cost_estimate=cost,
        )(alphas, *tensor_args)
        return jax.block_until_ready(out)

    try:
        out = run(True)
    except Exception:
        # pl.Buffered(1) not supported by this jax/libtpu combination; fall
        # back to default double-buffered grid-invariant operands (correct,
        # just uses a bit more VMEM).
        out = run(False)

    return out[:N, :out_ft]


def init_params(key, in_ft, out_ft):
    ks = jax.random.split(key, 4)

    def linear(k, fan_in, fan_out):
        # mimic nn.Linear default init (uniform +/- 1/sqrt(fan_in))
        bound = 1.0 / jnp.sqrt(jnp.float32(fan_in))
        kw, kb = jax.random.split(k)
        w = jax.random.uniform(kw, (fan_in, fan_out), jnp.float32, -bound, bound)
        b = jax.random.uniform(kb, (1, fan_out), jnp.float32, -bound, bound)
        return w, b

    w1, b1 = linear(ks[0], in_ft, out_ft)
    w2, b2 = linear(ks[1], out_ft, out_ft)
    w3, b3 = linear(ks[2], out_ft, out_ft)
    ws, bs = linear(ks[3], in_ft, out_ft)

    ones = jnp.ones((1, out_ft), jnp.float32)
    zeros = jnp.zeros((1, out_ft), jnp.float32)
    alpha = jnp.array(0.25, jnp.float32)  # nn.PReLU default (single param)

    return dict(
        w1=w1, b1=b1, g1=ones, be1=zeros, a1=alpha,
        w2=w2, b2=b2, g2=ones, be2=zeros, a2=alpha,
        w3=w3, b3=b3, g3=ones, be3=zeros, a3=alpha,
        ws=ws, bs=bs,
    )


def mlp_ref(x, p, *, matmul_dtype=jnp.bfloat16):
    # Pure-JAX reference with the same matmul dtype as the kernel
    # (bf16 MXU operands, f32 accumulation; LayerNorm/PReLU in f32).
    def dot(a, b):
        return jnp.dot(a.astype(matmul_dtype), b.astype(matmul_dtype),
                       preferred_element_type=jnp.float32)

    def lnp(h, g, be, a):
        mean = jnp.mean(h, axis=-1, keepdims=True)
        var = jnp.mean((h - mean) ** 2, axis=-1, keepdims=True)
        h = (h - mean) * jax.lax.rsqrt(var + EPS) * g + be
        return jnp.where(h >= 0, h, a * h)

    h = lnp(dot(x, p["w1"]) + p["b1"], p["g1"], p["be1"], p["a1"])
    h = lnp(dot(h, p["w2"]) + p["b2"], p["g2"], p["be2"], p["a2"])
    h = lnp(dot(h, p["w3"]) + p["b3"], p["g3"], p["be3"], p["a3"])
    return h + dot(x, p["ws"]) + p["bs"]


if __name__ == "__main__":
    key = jax.random.PRNGKey(0)
    kx, kp = jax.random.split(key)

    N, in_ft, out_ft = 16, 32, 32
    x = jax.random.normal(kx, (N, in_ft), jnp.float32)
    params = init_params(kp, in_ft, out_ft)

    out = mlp_pallas(x, params)
    out = jax.block_until_ready(out)

    ref = mlp_ref(x, params)
    assert out.shape == (N, out_ft)
    assert jnp.allclose(out, ref, atol=2e-3, rtol=2e-3), "mismatch vs reference"

    print("KERNEL_OK")
</pallas_src>

<mosaic_0001>
module attributes {stable_mosaic.version = 11 : i64} {
  func.func @mlp_kernel(%arg0: i32, %arg1: memref<3xf32, #tpu.memory_space<smem>>, %arg2: memref<16x128xbf16, #tpu.memory_space<vmem>>, %arg3: memref<128x128xbf16, #tpu.memory_space<vmem>>, %arg4: memref<128x128xbf16, #tpu.memory_space<vmem>>, %arg5: memref<128x128xbf16, #tpu.memory_space<vmem>>, %arg6: memref<128x128xbf16, #tpu.memory_space<vmem>>, %arg7: memref<16x128xf32, #tpu.memory_space<vmem>>, %arg8: memref<16x128xf32, #tpu.memory_space<vmem>>) attributes {dimension_semantics = [#tpu.dimension_semantics<parallel>], iteration_bounds = array<i64: 1>, scalar_prefetch = 1 : i64, scratch_operands = 0 : i64, tpu.core_type = #tpu.core_type<tc>, window_params = [{transform_indices = @transform_0, window_bounds = array<i64: 16, 128>}, {pipeline_mode = #tpu.pipeline_mode<synchronous>, transform_indices = @transform_1, window_bounds = array<i64: 128, 128>}, {pipeline_mode = #tpu.pipeline_mode<synchronous>, transform_indices = @transform_2, window_bounds = array<i64: 128, 128>}, {pipeline_mode = #tpu.pipeline_mode<synchronous>, transform_indices = @transform_3, window_bounds = array<i64: 128, 128>}, {pipeline_mode = #tpu.pipeline_mode<synchronous>, transform_indices = @transform_4, window_bounds = array<i64: 128, 128>}, {pipeline_mode = #tpu.pipeline_mode<synchronous>, transform_indices = @transform_5, window_bounds = array<i64: 16, 128>}, {transform_indices = @transform_6, window_bounds = array<i64: 16, 128>}]} {
    %c0 = arith.constant 0 : index
    %c0_0 = arith.constant 0 : index
    %0 = vector.load %arg7[%c0, %c0_0] : memref<16x128xf32, #tpu.memory_space<vmem>>, vector<16x128xf32>
    %1 = vector.extract_strided_slice %0 {offsets = [0, 0], sizes = [1, 128], strides = [1, 1]} : vector<16x128xf32> to vector<1x128xf32>
    %2 = vector.extract_strided_slice %0 {offsets = [1, 0], sizes = [1, 128], strides = [1, 1]} : vector<16x128xf32> to vector<1x128xf32>
    %3 = vector.extract_strided_slice %0 {offsets = [2, 0], sizes = [1, 128], strides = [1, 1]} : vector<16x128xf32> to vector<1x128xf32>
    %4 = vector.extract_strided_slice %0 {offsets = [3, 0], sizes = [1, 128], strides = [1, 1]} : vector<16x128xf32> to vector<1x128xf32>
    %5 = vector.extract_strided_slice %0 {offsets = [4, 0], sizes = [1, 128], strides = [1, 1]} : vector<16x128xf32> to vector<1x128xf32>
    %6 = vector.extract_strided_slice %0 {offsets = [5, 0], sizes = [1, 128], strides = [1, 1]} : vector<16x128xf32> to vector<1x128xf32>
    %7 = vector.extract_strided_slice %0 {offsets = [6, 0], sizes = [1, 128], strides = [1, 1]} : vector<16x128xf32> to vector<1x128xf32>
    %8 = vector.extract_strided_slice %0 {offsets = [7, 0], sizes = [1, 128], strides = [1, 1]} : vector<16x128xf32> to vector<1x128xf32>
    %9 = vector.extract_strided_slice %0 {offsets = [8, 0], sizes = [1, 128], strides = [1, 1]} : vector<16x128xf32> to vector<1x128xf32>
    %10 = vector.extract_strided_slice %0 {offsets = [9, 0], sizes = [1, 128], strides = [1, 1]} : vector<16x128xf32> to vector<1x128xf32>
    %c0_1 = arith.constant 0 : index
    %c0_2 = arith.constant 0 : index
    %11 = vector.load %arg3[%c0_1, %c0_2] : memref<128x128xbf16, #tpu.memory_space<vmem>>, vector<128x128xbf16>
    %c0_3 = arith.constant 0 : index
    %c0_4 = arith.constant 0 : index
    %12 = vector.load %arg4[%c0_3, %c0_4] : memref<128x128xbf16, #tpu.memory_space<vmem>>, vector<128x128xbf16>
    %c0_5 = arith.constant 0 : index
    %c0_6 = arith.constant 0 : index
    %13 = vector.load %arg5[%c0_5, %c0_6] : memref<128x128xbf16, #tpu.memory_space<vmem>>, vector<128x128xbf16>
    %c0_7 = arith.constant 0 : index
    %c0_8 = arith.constant 0 : index
    %14 = vector.load %arg6[%c0_7, %c0_8] : memref<128x128xbf16, #tpu.memory_space<vmem>>, vector<128x128xbf16>
    %c0_9 = arith.constant 0 : index
    %15 = memref.load %arg1[%c0_9] : memref<3xf32, #tpu.memory_space<smem>>
    %c1 = arith.constant 1 : index
    %16 = memref.load %arg1[%c1] : memref<3xf32, #tpu.memory_space<smem>>
    %c2 = arith.constant 2 : index
    %17 = memref.load %arg1[%c2] : memref<3xf32, #tpu.memory_space<smem>>
    %c0_10 = arith.constant 0 : index
    %c0_11 = arith.constant 0 : index
    %18 = vector.load %arg2[%c0_10, %c0_11] : memref<16x128xbf16, #tpu.memory_space<vmem>>, vector<16x128xbf16>
    %cst = arith.constant dense<0.000000e+00> : vector<16x128xf32>
    %19 = tpu.matmul %18, %11, %cst {dimension_numbers = #tpu.dot_dimension_numbers<[1], [0], [0], [1], [0, 0, 1, 1], [], []>} : vector<16x128xbf16>, vector<128x128xbf16>, vector<16x128xf32> -> vector<16x128xf32>
    %20 = vector.broadcast %1 : vector<1x128xf32> to vector<16x128xf32>
    %21 = arith.addf %19, %20 : vector<16x128xf32>
    %cst_12 = arith.constant dense<0.000000e+00> : vector<16xf32>
    %22 = vector.multi_reduction <add>, %21, %cst_12 [1] : vector<16x128xf32> to vector<16xf32>
    %23 = vector.shape_cast %22 : vector<16xf32> to vector<16x1xf32>
    %cst_13 = arith.constant 3.125000e-02 : f32
    %24 = vector.broadcast %cst_13 : f32 to vector<16x1xf32>
    %25 = arith.mulf %23, %24 : vector<16x1xf32>
    %26 = vector.broadcast %25 : vector<16x1xf32> to vector<16x128xf32>
    %27 = arith.subf %21, %26 : vector<16x128xf32>
    %28 = arith.mulf %27, %27 : vector<16x128xf32>
    %cst_14 = arith.constant dense<0.000000e+00> : vector<16xf32>
    %29 = vector.multi_reduction <add>, %28, %cst_14 [1] : vector<16x128xf32> to vector<16xf32>
    %30 = vector.shape_cast %29 : vector<16xf32> to vector<16x1xf32>
    %31 = arith.mulf %25, %25 : vector<16x1xf32>
    %cst_15 = arith.constant 9.600000e+01 : f32
    %32 = vector.broadcast %cst_15 : f32 to vector<16x1xf32>
    %33 = arith.mulf %32, %31 : vector<16x1xf32>
    %34 = arith.subf %30, %33 : vector<16x1xf32>
    %cst_16 = arith.constant 3.125000e-02 : f32
    %35 = vector.broadcast %cst_16 : f32 to vector<16x1xf32>
    %36 = arith.mulf %34, %35 : vector<16x1xf32>
    %cst_17 = arith.constant 9.99999974E-6 : f32
    %37 = vector.broadcast %cst_17 : f32 to vector<16x1xf32>
    %38 = arith.addf %36, %37 : vector<16x1xf32>
    %39 = math.rsqrt %38 : vector<16x1xf32>
    %40 = vector.broadcast %39 : vector<16x1xf32> to vector<16x128xf32>
    %41 = arith.mulf %27, %40 : vector<16x128xf32>
    %42 = vector.broadcast %2 : vector<1x128xf32> to vector<16x128xf32>
    %43 = arith.mulf %41, %42 : vector<16x128xf32>
    %44 = vector.broadcast %3 : vector<1x128xf32> to vector<16x128xf32>
    %45 = arith.addf %43, %44 : vector<16x128xf32>
    %cst_18 = arith.constant 0.000000e+00 : f32
    %46 = vector.broadcast %cst_18 : f32 to vector<16x128xf32>
    %47 = arith.cmpf oge, %45, %46 : vector<16x128xf32>
    %48 = vector.broadcast %15 : f32 to vector<16x128xf32>
    %49 = arith.mulf %48, %45 : vector<16x128xf32>
    %50 = arith.select %47, %45, %49 : vector<16x128xi1>, vector<16x128xf32>
    %51 = arith.truncf %50 : vector<16x128xf32> to vector<16x128xbf16>
    %cst_19 = arith.constant dense<0.000000e+00> : vector<16x128xf32>
    %52 = tpu.matmul %51, %12, %cst_19 {dimension_numbers = #tpu.dot_dimension_numbers<[1], [0], [0], [1], [0, 0, 1, 1], [], []>} : vector<16x128xbf16>, vector<128x128xbf16>, vector<16x128xf32> -> vector<16x128xf32>
    %53 = vector.broadcast %4 : vector<1x128xf32> to vector<16x128xf32>
    %54 = arith.addf %52, %53 : vector<16x128xf32>
    %cst_20 = arith.constant dense<0.000000e+00> : vector<16xf32>
    %55 = vector.multi_reduction <add>, %54, %cst_20 [1] : vector<16x128xf32> to vector<16xf32>
    %56 = vector.shape_cast %55 : vector<16xf32> to vector<16x1xf32>
    %cst_21 = arith.constant 3.125000e-02 : f32
    %57 = vector.broadcast %cst_21 : f32 to vector<16x1xf32>
    %58 = arith.mulf %56, %57 : vector<16x1xf32>
    %59 = vector.broadcast %58 : vector<16x1xf32> to vector<16x128xf32>
    %60 = arith.subf %54, %59 : vector<16x128xf32>
    %61 = arith.mulf %60, %60 : vector<16x128xf32>
    %cst_22 = arith.constant dense<0.000000e+00> : vector<16xf32>
    %62 = vector.multi_reduction <add>, %61, %cst_22 [1] : vector<16x128xf32> to vector<16xf32>
    %63 = vector.shape_cast %62 : vector<16xf32> to vector<16x1xf32>
    %64 = arith.mulf %58, %58 : vector<16x1xf32>
    %cst_23 = arith.constant 9.600000e+01 : f32
    %65 = vector.broadcast %cst_23 : f32 to vector<16x1xf32>
    %66 = arith.mulf %65, %64 : vector<16x1xf32>
    %67 = arith.subf %63, %66 : vector<16x1xf32>
    %cst_24 = arith.constant 3.125000e-02 : f32
    %68 = vector.broadcast %cst_24 : f32 to vector<16x1xf32>
    %69 = arith.mulf %67, %68 : vector<16x1xf32>
    %cst_25 = arith.constant 9.99999974E-6 : f32
    %70 = vector.broadcast %cst_25 : f32 to vector<16x1xf32>
    %71 = arith.addf %69, %70 : vector<16x1xf32>
    %72 = math.rsqrt %71 : vector<16x1xf32>
    %73 = vector.broadcast %72 : vector<16x1xf32> to vector<16x128xf32>
    %74 = arith.mulf %60, %73 : vector<16x128xf32>
    %75 = vector.broadcast %5 : vector<1x128xf32> to vector<16x128xf32>
    %76 = arith.mulf %74, %75 : vector<16x128xf32>
    %77 = vector.broadcast %6 : vector<1x128xf32> to vector<16x128xf32>
    %78 = arith.addf %76, %77 : vector<16x128xf32>
    %cst_26 = arith.constant 0.000000e+00 : f32
    %79 = vector.broadcast %cst_26 : f32 to vector<16x128xf32>
    %80 = arith.cmpf oge, %78, %79 : vector<16x128xf32>
    %81 = vector.broadcast %16 : f32 to vector<16x128xf32>
    %82 = arith.mulf %81, %78 : vector<16x128xf32>
    %83 = arith.select %80, %78, %82 : vector<16x128xi1>, vector<16x128xf32>
    %84 = arith.truncf %83 : vector<16x128xf32> to vector<16x128xbf16>
    %cst_27 = arith.constant dense<0.000000e+00> : vector<16x128xf32>
    %85 = tpu.matmul %84, %13, %cst_27 {dimension_numbers = #tpu.dot_dimension_numbers<[1], [0], [0], [1], [0, 0, 1, 1], [], []>} : vector<16x128xbf16>, vector<128x128xbf16>, vector<16x128xf32> -> vector<16x128xf32>
    %86 = vector.broadcast %7 : vector<1x128xf32> to vector<16x128xf32>
    %87 = arith.addf %85, %86 : vector<16x128xf32>
    %cst_28 = arith.constant dense<0.000000e+00> : vector<16xf32>
    %88 = vector.multi_reduction <add>, %87, %cst_28 [1] : vector<16x128xf32> to vector<16xf32>
    %89 = vector.shape_cast %88 : vector<16xf32> to vector<16x1xf32>
    %cst_29 = arith.constant 3.125000e-02 : f32
    %90 = vector.broadcast %cst_29 : f32 to vector<16x1xf32>
    %91 = arith.mulf %89, %90 : vector<16x1xf32>
    %92 = vector.broadcast %91 : vector<16x1xf32> to vector<16x128xf32>
    %93 = arith.subf %87, %92 : vector<16x128xf32>
    %94 = arith.mulf %93, %93 : vector<16x128xf32>
    %cst_30 = arith.constant dense<0.000000e+00> : vector<16xf32>
    %95 = vector.multi_reduction <add>, %94, %cst_30 [1] : vector<16x128xf32> to vector<16xf32>
    %96 = vector.shape_cast %95 : vector<16xf32> to vector<16x1xf32>
    %97 = arith.mulf %91, %91 : vector<16x1xf32>
    %cst_31 = arith.constant 9.600000e+01 : f32
    %98 = vector.broadcast %cst_31 : f32 to vector<16x1xf32>
    %99 = arith.mulf %98, %97 : vector<16x1xf32>
    %100 = arith.subf %96, %99 : vector<16x1xf32>
    %cst_32 = arith.constant 3.125000e-02 : f32
    %101 = vector.broadcast %cst_32 : f32 to vector<16x1xf32>
    %102 = arith.mulf %100, %101 : vector<16x1xf32>
    %cst_33 = arith.constant 9.99999974E-6 : f32
    %103 = vector.broadcast %cst_33 : f32 to vector<16x1xf32>
    %104 = arith.addf %102, %103 : vector<16x1xf32>
    %105 = math.rsqrt %104 : vector<16x1xf32>
    %106 = vector.broadcast %105 : vector<16x1xf32> to vector<16x128xf32>
    %107 = arith.mulf %93, %106 : vector<16x128xf32>
    %108 = vector.broadcast %8 : vector<1x128xf32> to vector<16x128xf32>
    %109 = arith.mulf %107, %108 : vector<16x128xf32>
    %110 = vector.broadcast %9 : vector<1x128xf32> to vector<16x128xf32>
    %111 = arith.addf %109, %110 : vector<16x128xf32>
    %cst_34 = arith.constant 0.000000e+00 : f32
    %112 = vector.broadcast %cst_34 : f32 to vector<16x128xf32>
    %113 = arith.cmpf oge, %111, %112 : vector<16x128xf32>
    %114 = vector.broadcast %17 : f32 to vector<16x128xf32>
    %115 = arith.mulf %114, %111 : vector<16x128xf32>
    %116 = arith.select %113, %111, %115 : vector<16x128xi1>, vector<16x128xf32>
    %cst_35 = arith.constant dense<0.000000e+00> : vector<16x128xf32>
    %117 = tpu.matmul %18, %14, %cst_35 {dimension_numbers = #tpu.dot_dimension_numbers<[1], [0], [0], [1], [0, 0, 1, 1], [], []>} : vector<16x128xbf16>, vector<128x128xbf16>, vector<16x128xf32> -> vector<16x128xf32>
    %118 = vector.broadcast %10 : vector<1x128xf32> to vector<16x128xf32>
    %119 = arith.addf %117, %118 : vector<16x128xf32>
    %120 = arith.addf %116, %119 : vector<16x128xf32>
    %c0_36 = arith.constant 0 : index
    %c0_37 = arith.constant 0 : index
    %121 = vector.load %arg8[%c0_36, %c0_37] : memref<16x128xf32, #tpu.memory_space<vmem>>, vector<16x128xf32>
    tpu.vector_store %arg8[%c0_36, %c0_37], %120 {strides = array<i32>} : memref<16x128xf32, #tpu.memory_space<vmem>>, vector<16x128xf32>,
    return
  }
  func.func @transform_0(%arg0: i32, %arg1: memref<3xf32, #tpu.memory_space<smem>>) -> (i32, i32) {
    %c0_i32 = arith.constant 0 : i32
    %c0_i32_0 = arith.constant 0 : i32
    return %arg0, %c0_i32 : i32, i32
  }
  func.func @transform_1(%arg0: i32, %arg1: memref<3xf32, #tpu.memory_space<smem>>) -> (i32, i32) {
    %c0_i32 = arith.constant 0 : i32
    %c0_i32_0 = arith.constant 0 : i32
    %c0_i32_1 = arith.constant 0 : i32
    return %c0_i32, %c0_i32_0 : i32, i32
  }
  func.func @transform_2(%arg0: i32, %arg1: memref<3xf32, #tpu.memory_space<smem>>) -> (i32, i32) {
    %c0_i32 = arith.constant 0 : i32
    %c0_i32_0 = arith.constant 0 : i32
    %c0_i32_1 = arith.constant 0 : i32
    return %c0_i32, %c0_i32_0 : i32, i32
  }
  func.func @transform_3(%arg0: i32, %arg1: memref<3xf32, #tpu.memory_space<smem>>) -> (i32, i32) {
    %c0_i32 = arith.constant 0 : i32
    %c0_i32_0 = arith.constant 0 : i32
    %c0_i32_1 = arith.constant 0 : i32
    return %c0_i32, %c0_i32_0 : i32, i32
  }
  func.func @transform_4(%arg0: i32, %arg1: memref<3xf32, #tpu.memory_space<smem>>) -> (i32, i32) {
    %c0_i32 = arith.constant 0 : i32
    %c0_i32_0 = arith.constant 0 : i32
    %c0_i32_1 = arith.constant 0 : i32
    return %c0_i32, %c0_i32_0 : i32, i32
  }
  func.func @transform_5(%arg0: i32, %arg1: memref<3xf32, #tpu.memory_space<smem>>) -> (i32, i32) {
    %c0_i32 = arith.constant 0 : i32
    %c0_i32_0 = arith.constant 0 : i32
    %c0_i32_1 = arith.constant 0 : i32
    return %c0_i32, %c0_i32_0 : i32, i32
  }
  func.func @transform_6(%arg0: i32, %arg1: memref<3xf32, #tpu.memory_space<smem>>) -> (i32, i32) {
    %c0_i32 = arith.constant 0 : i32
    %c0_i32_0 = arith.constant 0 : i32
    return %arg0, %c0_i32 : i32, i32
  }
}

module attributes {stable_mosaic.version = 11 : i64} {
  func.func @mlp_kernel(%arg0: i32, %arg1: memref<3xf32, #tpu.memory_space<smem>>, %arg2: memref<16x128xbf16, #tpu.memory_space<vmem>>, %arg3: memref<128x128xbf16, #tpu.memory_space<vmem>>, %arg4: memref<128x128xbf16, #tpu.memory_space<vmem>>, %arg5: memref<128x128xbf16, #tpu.memory_space<vmem>>, %arg6: memref<128x128xbf16, #tpu.memory_space<vmem>>, %arg7: memref<16x128xf32, #tpu.memory_space<vmem>>, %arg8: memref<16x128xf32, #tpu.memory_space<vmem>>) attributes {dimension_semantics = [#tpu.dimension_semantics<parallel>], iteration_bounds = array<i64: 1>, scalar_prefetch = 1 : i64, scratch_operands = 0 : i64, tpu.core_type = #tpu.core_type<tc>, window_params = [{transform_indices = @transform_0, window_bounds = array<i64: 16, 128>}, {pipeline_mode = #tpu.pipeline_mode<synchronous>, transform_indices = @transform_1, window_bounds = array<i64: 128, 128>}, {pipeline_mode = #tpu.pipeline_mode<synchronous>, transform_indices = @transform_2, window_bounds = array<i64: 128, 128>}, {pipeline_mode = #tpu.pipeline_mode<synchronous>, transform_indices = @transform_3, window_bounds = array<i64: 128, 128>}, {pipeline_mode = #tpu.pipeline_mode<synchronous>, transform_indices = @transform_4, window_bounds = array<i64: 128, 128>}, {pipeline_mode = #tpu.pipeline_mode<synchronous>, transform_indices = @transform_5, window_bounds = array<i64: 16, 128>}, {transform_indices = @transform_6, window_bounds = array<i64: 16, 128>}]} {
    %c0 = arith.constant 0 : index
    %c0_0 = arith.constant 0 : index
    %0 = vector.load %arg7[%c0, %c0_0] : memref<16x128xf32, #tpu.memory_space<vmem>>, vector<16x128xf32>
    %1 = vector.extract_strided_slice %0 {offsets = [0, 0], sizes = [1, 128], strides = [1, 1]} : vector<16x128xf32> to vector<1x128xf32>
    %2 = vector.extract_strided_slice %0 {offsets = [1, 0], sizes = [1, 128], strides = [1, 1]} : vector<16x128xf32> to vector<1x128xf32>
    %3 = vector.extract_strided_slice %0 {offsets = [2, 0], sizes = [1, 128], strides = [1, 1]} : vector<16x128xf32> to vector<1x128xf32>
    %4 = vector.extract_strided_slice %0 {offsets = [3, 0], sizes = [1, 128], strides = [1, 1]} : vector<16x128xf32> to vector<1x128xf32>
    %5 = vector.extract_strided_slice %0 {offsets = [4, 0], sizes = [1, 128], strides = [1, 1]} : vector<16x128xf32> to vector<1x128xf32>
    %6 = vector.extract_strided_slice %0 {offsets = [5, 0], sizes = [1, 128], strides = [1, 1]} : vector<16x128xf32> to vector<1x128xf32>
    %7 = vector.extract_strided_slice %0 {offsets = [6, 0], sizes = [1, 128], strides = [1, 1]} : vector<16x128xf32> to vector<1x128xf32>
    %8 = vector.extract_strided_slice %0 {offsets = [7, 0], sizes = [1, 128], strides = [1, 1]} : vector<16x128xf32> to vector<1x128xf32>
    %9 = vector.extract_strided_slice %0 {offsets = [8, 0], sizes = [1, 128], strides = [1, 1]} : vector<16x128xf32> to vector<1x128xf32>
    %10 = vector.extract_strided_slice %0 {offsets = [9, 0], sizes = [1, 128], strides = [1, 1]} : vector<16x128xf32> to vector<1x128xf32>
    %c0_1 = arith.constant 0 : index
    %c0_2 = arith.constant 0 : index
    %11 = vector.load %arg3[%c0_1, %c0_2] : memref<128x128xbf16, #tpu.memory_space<vmem>>, vector<128x128xbf16>
    %c0_3 = arith.constant 0 : index
    %c0_4 = arith.constant 0 : index
    %12 = vector.load %arg4[%c0_3, %c0_4] : memref<128x128xbf16, #tpu.memory_space<vmem>>, vector<128x128xbf16>
    %c0_5 = arith.constant 0 : index
    %c0_6 = arith.constant 0 : index
    %13 = vector.load %arg5[%c0_5, %c0_6] : memref<128x128xbf16, #tpu.memory_space<vmem>>, vector<128x128xbf16>
    %c0_7 = arith.constant 0 : index
    %c0_8 = arith.constant 0 : index
    %14 = vector.load %arg6[%c0_7, %c0_8] : memref<128x128xbf16, #tpu.memory_space<vmem>>, vector<128x128xbf16>
    %c0_9 = arith.constant 0 : index
    %15 = memref.load %arg1[%c0_9] : memref<3xf32, #tpu.memory_space<smem>>
    %c1 = arith.constant 1 : index
    %16 = memref.load %arg1[%c1] : memref<3xf32, #tpu.memory_space<smem>>
    %c2 = arith.constant 2 : index
    %17 = memref.load %arg1[%c2] : memref<3xf32, #tpu.memory_space<smem>>
    %c0_10 = arith.constant 0 : index
    %c0_11 = arith.constant 0 : index
    %18 = vector.load %arg2[%c0_10, %c0_11] : memref<16x128xbf16, #tpu.memory_space<vmem>>, vector<16x128xbf16>
    %cst = arith.constant dense<0.000000e+00> : vector<16x128xf32>
    %19 = tpu.matmul %18, %11, %cst {dimension_numbers = #tpu.dot_dimension_numbers<[1], [0], [0], [1], [0, 0, 1, 1], [], []>} : vector<16x128xbf16>, vector<128x128xbf16>, vector<16x128xf32> -> vector<16x128xf32>
    %20 = vector.broadcast %1 : vector<1x128xf32> to vector<16x128xf32>
    %21 = arith.addf %19, %20 : vector<16x128xf32>
    %cst_12 = arith.constant dense<0.000000e+00> : vector<16xf32>
    %22 = vector.multi_reduction <add>, %21, %cst_12 [1] : vector<16x128xf32> to vector<16xf32>
    %23 = vector.shape_cast %22 : vector<16xf32> to vector<16x1xf32>
    %cst_13 = arith.constant 3.125000e-02 : f32
    %24 = vector.broadcast %cst_13 : f32 to vector<16x1xf32>
    %25 = arith.mulf %23, %24 : vector<16x1xf32>
    %26 = vector.broadcast %25 : vector<16x1xf32> to vector<16x128xf32>
    %27 = arith.subf %21, %26 : vector<16x128xf32>
    %28 = arith.mulf %27, %27 : vector<16x128xf32>
    %cst_14 = arith.constant dense<0.000000e+00> : vector<16xf32>
    %29 = vector.multi_reduction <add>, %28, %cst_14 [1] : vector<16x128xf32> to vector<16xf32>
    %30 = vector.shape_cast %29 : vector<16xf32> to vector<16x1xf32>
    %31 = arith.mulf %25, %25 : vector<16x1xf32>
    %cst_15 = arith.constant 9.600000e+01 : f32
    %32 = vector.broadcast %cst_15 : f32 to vector<16x1xf32>
    %33 = arith.mulf %32, %31 : vector<16x1xf32>
    %34 = arith.subf %30, %33 : vector<16x1xf32>
    %cst_16 = arith.constant 3.125000e-02 : f32
    %35 = vector.broadcast %cst_16 : f32 to vector<16x1xf32>
    %36 = arith.mulf %34, %35 : vector<16x1xf32>
    %cst_17 = arith.constant 9.99999974E-6 : f32
    %37 = vector.broadcast %cst_17 : f32 to vector<16x1xf32>
    %38 = arith.addf %36, %37 : vector<16x1xf32>
    %39 = math.rsqrt %38 : vector<16x1xf32>
    %40 = vector.broadcast %39 : vector<16x1xf32> to vector<16x128xf32>
    %41 = arith.mulf %27, %40 : vector<16x128xf32>
    %42 = vector.broadcast %2 : vector<1x128xf32> to vector<16x128xf32>
    %43 = arith.mulf %41, %42 : vector<16x128xf32>
    %44 = vector.broadcast %3 : vector<1x128xf32> to vector<16x128xf32>
    %45 = arith.addf %43, %44 : vector<16x128xf32>
    %cst_18 = arith.constant 0.000000e+00 : f32
    %46 = vector.broadcast %cst_18 : f32 to vector<16x128xf32>
    %47 = arith.cmpf oge, %45, %46 : vector<16x128xf32>
    %48 = vector.broadcast %15 : f32 to vector<16x128xf32>
    %49 = arith.mulf %48, %45 : vector<16x128xf32>
    %50 = arith.select %47, %45, %49 : vector<16x128xi1>, vector<16x128xf32>
    %51 = arith.truncf %50 : vector<16x128xf32> to vector<16x128xbf16>
    %cst_19 = arith.constant dense<0.000000e+00> : vector<16x128xf32>
    %52 = tpu.matmul %51, %12, %cst_19 {dimension_numbers = #tpu.dot_dimension_numbers<[1], [0], [0], [1], [0, 0, 1, 1], [], []>} : vector<16x128xbf16>, vector<128x128xbf16>, vector<16x128xf32> -> vector<16x128xf32>
    %53 = vector.broadcast %4 : vector<1x128xf32> to vector<16x128xf32>
    %54 = arith.addf %52, %53 : vector<16x128xf32>
    %cst_20 = arith.constant dense<0.000000e+00> : vector<16xf32>
    %55 = vector.multi_reduction <add>, %54, %cst_20 [1] : vector<16x128xf32> to vector<16xf32>
    %56 = vector.shape_cast %55 : vector<16xf32> to vector<16x1xf32>
    %cst_21 = arith.constant 3.125000e-02 : f32
    %57 = vector.broadcast %cst_21 : f32 to vector<16x1xf32>
    %58 = arith.mulf %56, %57 : vector<16x1xf32>
    %59 = vector.broadcast %58 : vector<16x1xf32> to vector<16x128xf32>
    %60 = arith.subf %54, %59 : vector<16x128xf32>
    %61 = arith.mulf %60, %60 : vector<16x128xf32>
    %cst_22 = arith.constant dense<0.000000e+00> : vector<16xf32>
    %62 = vector.multi_reduction <add>, %61, %cst_22 [1] : vector<16x128xf32> to vector<16xf32>
    %63 = vector.shape_cast %62 : vector<16xf32> to vector<16x1xf32>
    %64 = arith.mulf %58, %58 : vector<16x1xf32>
    %cst_23 = arith.constant 9.600000e+01 : f32
    %65 = vector.broadcast %cst_23 : f32 to vector<16x1xf32>
    %66 = arith.mulf %65, %64 : vector<16x1xf32>
    %67 = arith.subf %63, %66 : vector<16x1xf32>
    %cst_24 = arith.constant 3.125000e-02 : f32
    %68 = vector.broadcast %cst_24 : f32 to vector<16x1xf32>
    %69 = arith.mulf %67, %68 : vector<16x1xf32>
    %cst_25 = arith.constant 9.99999974E-6 : f32
    %70 = vector.broadcast %cst_25 : f32 to vector<16x1xf32>
    %71 = arith.addf %69, %70 : vector<16x1xf32>
    %72 = math.rsqrt %71 : vector<16x1xf32>
    %73 = vector.broadcast %72 : vector<16x1xf32> to vector<16x128xf32>
    %74 = arith.mulf %60, %73 : vector<16x128xf32>
    %75 = vector.broadcast %5 : vector<1x128xf32> to vector<16x128xf32>
    %76 = arith.mulf %74, %75 : vector<16x128xf32>
    %77 = vector.broadcast %6 : vector<1x128xf32> to vector<16x128xf32>
    %78 = arith.addf %76, %77 : vector<16x128xf32>
    %cst_26 = arith.constant 0.000000e+00 : f32
    %79 = vector.broadcast %cst_26 : f32 to vector<16x128xf32>
    %80 = arith.cmpf oge, %78, %79 : vector<16x128xf32>
    %81 = vector.broadcast %16 : f32 to vector<16x128xf32>
    %82 = arith.mulf %81, %78 : vector<16x128xf32>
    %83 = arith.select %80, %78, %82 : vector<16x128xi1>, vector<16x128xf32>
    %84 = arith.truncf %83 : vector<16x128xf32> to vector<16x128xbf16>
    %cst_27 = arith.constant dense<0.000000e+00> : vector<16x128xf32>
    %85 = tpu.matmul %84, %13, %cst_27 {dimension_numbers = #tpu.dot_dimension_numbers<[1], [0], [0], [1], [0, 0, 1, 1], [], []>} : vector<16x128xbf16>, vector<128x128xbf16>, vector<16x128xf32> -> vector<16x128xf32>
    %86 = vector.broadcast %7 : vector<1x128xf32> to vector<16x128xf32>
    %87 = arith.addf %85, %86 : vector<16x128xf32>
    %cst_28 = arith.constant dense<0.000000e+00> : vector<16xf32>
    %88 = vector.multi_reduction <add>, %87, %cst_28 [1] : vector<16x128xf32> to vector<16xf32>
    %89 = vector.shape_cast %88 : vector<16xf32> to vector<16x1xf32>
    %cst_29 = arith.constant 3.125000e-02 : f32
    %90 = vector.broadcast %cst_29 : f32 to vector<16x1xf32>
    %91 = arith.mulf %89, %90 : vector<16x1xf32>
    %92 = vector.broadcast %91 : vector<16x1xf32> to vector<16x128xf32>
    %93 = arith.subf %87, %92 : vector<16x128xf32>
    %94 = arith.mulf %93, %93 : vector<16x128xf32>
    %cst_30 = arith.constant dense<0.000000e+00> : vector<16xf32>
    %95 = vector.multi_reduction <add>, %94, %cst_30 [1] : vector<16x128xf32> to vector<16xf32>
    %96 = vector.shape_cast %95 : vector<16xf32> to vector<16x1xf32>
    %97 = arith.mulf %91, %91 : vector<16x1xf32>
    %cst_31 = arith.constant 9.600000e+01 : f32
    %98 = vector.broadcast %cst_31 : f32 to vector<16x1xf32>
    %99 = arith.mulf %98, %97 : vector<16x1xf32>
    %100 = arith.subf %96, %99 : vector<16x1xf32>
    %cst_32 = arith.constant 3.125000e-02 : f32
    %101 = vector.broadcast %cst_32 : f32 to vector<16x1xf32>
    %102 = arith.mulf %100, %101 : vector<16x1xf32>
    %cst_33 = arith.constant 9.99999974E-6 : f32
    %103 = vector.broadcast %cst_33 : f32 to vector<16x1xf32>
    %104 = arith.addf %102, %103 : vector<16x1xf32>
    %105 = math.rsqrt %104 : vector<16x1xf32>
    %106 = vector.broadcast %105 : vector<16x1xf32> to vector<16x128xf32>
    %107 = arith.mulf %93, %106 : vector<16x128xf32>
    %108 = vector.broadcast %8 : vector<1x128xf32> to vector<16x128xf32>
    %109 = arith.mulf %107, %108 : vector<16x128xf32>
    %110 = vector.broadcast %9 : vector<1x128xf32> to vector<16x128xf32>
    %111 = arith.addf %109, %110 : vector<16x128xf32>
    %cst_34 = arith.constant 0.000000e+00 : f32
    %112 = vector.broadcast %cst_34 : f32 to vector<16x128xf32>
    %113 = arith.cmpf oge, %111, %112 : vector<16x128xf32>
    %114 = vector.broadcast %17 : f32 to vector<16x128xf32>
    %115 = arith.mulf %114, %111 : vector<16x128xf32>
    %116 = arith.select %113, %111, %115 : vector<16x128xi1>, vector<16x128xf32>
    %cst_35 = arith.constant dense<0.000000e+00> : vector<16x128xf32>
    %117 = tpu.matmul %18, %14, %cst_35 {dimension_numbers = #tpu.dot_dimension_numbers<[1], [0], [0], [1], [0, 0, 1, 1], [], []>} : vector<16x128xbf16>, vector<128x128xbf16>, vector<16x128xf32> -> vector<16x128xf32>
    %118 = vector.broadcast %10 : vector<1x128xf32> to vector<16x128xf32>
    %119 = arith.addf %117, %118 : vector<16x128xf32>
    %120 = arith.addf %116, %119 : vector<16x128xf32>
    %c0_36 = arith.constant 0 : index
    %c0_37 = arith.constant 0 : index
    %121 = vector.load %arg8[%c0_36, %c0_37] : memref<16x128xf32, #tpu.memory_space<vmem>>, vector<16x128xf32>
    tpu.vector_store %arg8[%c0_36, %c0_37], %120 {strides = array<i32>} : memref<16x128xf32, #tpu.memory_space<vmem>>, vector<16x128xf32>,
    return
  }
  func.func @transform_0(%arg0: i32, %arg1: memref<3xf32, #tpu.memory_space<smem>>) -> (i32, i32) {
    %c0_i32 = arith.constant 0 : i32
    %c0_i32_0 = arith.constant 0 : i32
    return %arg0, %c0_i32 : i32, i32
  }
  func.func @transform_1(%arg0: i32, %arg1: memref<3xf32, #tpu.memory_space<smem>>) -> (i32, i32) {
    %c0_i32 = arith.constant 0 : i32
    %c0_i32_0 = arith.constant 0 : i32
    %c0_i32_1 = arith.constant 0 : i32
    return %c0_i32, %c0_i32_0 : i32, i32
  }
  func.func @transform_2(%arg0: i32, %arg1: memref<3xf32, #tpu.memory_space<smem>>) -> (i32, i32) {
    %c0_i32 = arith.constant 0 : i32
    %c0_i32_0 = arith.constant 0 : i32
    %c0_i32_1 = arith.constant 0 : i32
    return %c0_i32, %c0_i32_0 : i32, i32
  }
  func.func @transform_3(%arg0: i32, %arg1: memref<3xf32, #tpu.memory_space<smem>>) -> (i32, i32) {
    %c0_i32 = arith.constant 0 : i32
    %c0_i32_0 = arith.constant 0 : i32
    %c0_i32_1 = arith.constant 0 : i32
    return %c0_i32, %c0_i32_0 : i32, i32
  }
  func.func @transform_4(%arg0: i32, %arg1: memref<3xf32, #tpu.memory_space<smem>>) -> (i32, i32) {
    %c0_i32 = arith.constant 0 : i32
    %c0_i32_0 = arith.constant 0 : i32
    %c0_i32_1 = arith.constant 0 : i32
    return %c0_i32, %c0_i32_0 : i32, i32
  }
  func.func @transform_5(%arg0: i32, %arg1: memref<3xf32, #tpu.memory_space<smem>>) -> (i32, i32) {
    %c0_i32 = arith.constant 0 : i32
    %c0_i32_0 = arith.constant 0 : i32
    %c0_i32_1 = arith.constant 0 : i32
    return %c0_i32, %c0_i32_0 : i32, i32
  }
  func.func @transform_6(%arg0: i32, %arg1: memref<3xf32, #tpu.memory_space<smem>>) -> (i32, i32) {
    %c0_i32 = arith.constant 0 : i32
    %c0_i32_0 = arith.constant 0 : i32
    return %arg0, %c0_i32 : i32, i32
  }
}

</mosaic_0001>

<llo_original>
// kernel: tpu_custom_call.1
$region0: #{tpu_custom_call.1}
  #allocation0 [shape = 'u32[]', space=smem, size = 0x4, offset = 0x4, fixed_abs, tag = 'smem constant byte address 0x4 - core index']
  #allocation1 [shape = 'u32[144,128]{1,0:T(1,128)}', space=vmem, size = 0x12000, scoped, tag = 'internal scratch']
  #allocation2 [shape = 's32[1]{0}', space=sflag, size = 0x4, scoped, tag = 'scoped memory for tpu_custom_call.1']
  #allocation3 [shape = 'u8[512]{0}', space=smem, size = 0x200, scoped, tag = 'prefetched SMEM operand 0']
  %s0 = inlined_call_operand.hbm [shape: f32[3], index: 0, kind: input, shape index: {}]
  %s1 = inlined_call_operand.hbm [shape: bf16[16,128], index: 1, kind: input, shape index: {}]
  %s2 = inlined_call_operand.hbm [shape: bf16[128,128], index: 2, kind: input, shape index: {}]
  %s3 = inlined_call_operand.hbm [shape: bf16[128,128], index: 3, kind: input, shape index: {}]
  %s4 = inlined_call_operand.hbm [shape: bf16[128,128], index: 4, kind: input, shape index: {}]
  %s5 = inlined_call_operand.hbm [shape: bf16[128,128], index: 5, kind: input, shape index: {}]
  %s6 = inlined_call_operand.hbm [shape: f32[16,128], index: 6, kind: input, shape index: {}]
  %s7 = inlined_call_operand.hbm [shape: f32[16,128], index: 7, kind: output, shape index: {}]
  %s8 = sld [smem:[#allocation0]]
  $region58: #{tpu_custom_call.1} parent=0
    _
  %s10 = ssub.s32 1, %s8
  %s11 = scalar_select 0, %s10, %s8
  %13 = dma.hbm_to_smem %s0, 16, [#allocation3], [#allocation2]
  %14 = dma.done [#allocation2], 16
  %15 = sfence
  $region1: #{tpu_custom_call.1} parent=0
    #allocation4 [shape = 'u8[4096]{0}', space=vmem, size = 0x1000, scoped, tag = 'input window, operand 1, single buffered']
    #allocation5 [shape = 's32[1]{0}', space=sflag, size = 0x4, scoped, tag = 'scoped memory for tpu_custom_call.1']
    #allocation6 [shape = 's32[1]{0}', space=sflag, size = 0x4, scoped, tag = 'scoped memory for tpu_custom_call.1']
    #allocation7 [shape = 'u8[32768]{0}', space=vmem, size = 0x8000, scoped, tag = 'input window, operand 2, single buffered']
    #allocation8 [shape = 's32[1]{0}', space=sflag, size = 0x4, scoped, tag = 'scoped memory for tpu_custom_call.1']
    #allocation9 [shape = 'u8[32768]{0}', space=vmem, size = 0x8000, scoped, tag = 'input window, operand 3, single buffered']
    #allocation10 [shape = 'u8[32768]{0}', space=vmem, size = 0x8000, scoped, tag = 'input window, operand 4, single buffered']
    #allocation11 [shape = 's32[1]{0}', space=sflag, size = 0x4, scoped, tag = 'scoped memory for tpu_custom_call.1']
    #allocation12 [shape = 'u8[32768]{0}', space=vmem, size = 0x8000, scoped, tag = 'input window, operand 5, single buffered']
    #allocation13 [shape = 'u8[8192]{0}', space=vmem, size = 0x2000, scoped, tag = 'input window, operand 6, single buffered']
    #allocation14 [shape = 's32[1]{0}', space=sflag, size = 0x4, scoped, tag = 'scoped memory for tpu_custom_call.1']
    #allocation15 [shape = 'u8[8192]{0}', space=vmem, size = 0x2000, scoped, tag = 'output window, operand 0, single buffered']
    %16 = vsyncpa [#allocation5], 0
    %17 = vsyncpa [#allocation8], 0
    %18 = vsyncpa [#allocation11], 0
    %19 = vsyncpa [#allocation14], 0
    %20 = vsyncpa [#allocation6], 0
    // Predicated region
    $region2: #{tpu_custom_call.1} parent=1 // pred_check
      _
    $region3: #{tpu_custom_call.1} parent=1 // pred_check_branch
      %22 = sbr.rel (0) target = $region5
    $region4: #{tpu_custom_call.1} parent=1 // pred_region
      %s24 = ssub.s32 128, 128
      %25 = vsyncadd [#allocation5], %s24
      %s26 = sshll.u32 [#allocation4], 4
      %s27 = int_to_ptr.vmem [resolvable:$true] %s26
      %32 = dma.hbm_to_vmem [thread:$0]  %s1, 128, %s27, [#allocation5], 64, 64, 4
    $region5: #{tpu_custom_call.1} parent=1 // pred_fallthru
      _
    // Predicated region
    $region6: #{tpu_custom_call.1} parent=1 // pred_check
      _
    $region7: #{tpu_custom_call.1} parent=1 // pred_check_branch
      %34 = sbr.rel (0) target = $region9
    $region8: #{tpu_custom_call.1} parent=1 // pred_region
      %s36 = ssub.s32 1024, 1024
      %37 = vsyncadd [#allocation8], %s36
      %s38 = sshll.u32 [#allocation7], 4
      %s39 = int_to_ptr.vmem [resolvable:$true] %s38
      %44 = dma.hbm_to_vmem [thread:$0]  %s2, 1024, %s39, [#allocation8], 64, 64, 4
    $region9: #{tpu_custom_call.1} parent=1 // pred_fallthru
      _
    // Predicated region
    $region10: #{tpu_custom_call.1} parent=1 // pred_check
      _
    $region11: #{tpu_custom_call.1} parent=1 // pred_check_branch
      %46 = sbr.rel (0) target = $region13
    $region12: #{tpu_custom_call.1} parent=1 // pred_region
      %s48 = ssub.s32 1024, 1024
      %49 = vsyncadd [#allocation8], %s48
      %s50 = sshll.u32 [#allocation9], 4
      %s51 = int_to_ptr.vmem [resolvable:$true] %s50
      %56 = dma.hbm_to_vmem [thread:$0]  %s3, 1024, %s51, [#allocation8], 64, 64, 4
    $region13: #{tpu_custom_call.1} parent=1 // pred_fallthru
      _
    // Predicated region
    $region14: #{tpu_custom_call.1} parent=1 // pred_check
      _
    $region15: #{tpu_custom_call.1} parent=1 // pred_check_branch
      %58 = sbr.rel (0) target = $region17
    $region16: #{tpu_custom_call.1} parent=1 // pred_region
      %s60 = ssub.s32 1024, 1024
      %61 = vsyncadd [#allocation11], %s60
      %s62 = sshll.u32 [#allocation10], 4
      %s63 = int_to_ptr.vmem [resolvable:$true] %s62
      %68 = dma.hbm_to_vmem [thread:$0]  %s4, 1024, %s63, [#allocation11], 64, 64, 4
    $region17: #{tpu_custom_call.1} parent=1 // pred_fallthru
      _
    // Predicated region
    $region18: #{tpu_custom_call.1} parent=1 // pred_check
      _
    $region19: #{tpu_custom_call.1} parent=1 // pred_check_branch
      %70 = sbr.rel (0) target = $region21
    $region20: #{tpu_custom_call.1} parent=1 // pred_region
      %s72 = ssub.s32 1024, 1024
      %73 = vsyncadd [#allocation11], %s72
      %s74 = sshll.u32 [#allocation12], 4
      %s75 = int_to_ptr.vmem [resolvable:$true] %s74
      %80 = dma.hbm_to_vmem [thread:$0]  %s5, 1024, %s75, [#allocation11], 64, 64, 4
    $region21: #{tpu_custom_call.1} parent=1 // pred_fallthru
      _
    // Predicated region
    $region22: #{tpu_custom_call.1} parent=1 // pred_check
      _
    $region23: #{tpu_custom_call.1} parent=1 // pred_check_branch
      %82 = sbr.rel (0) target = $region25
    $region24: #{tpu_custom_call.1} parent=1 // pred_region
      %s84 = ssub.s32 256, 256
      %85 = vsyncadd [#allocation14], %s84
      %s86 = sshll.u32 [#allocation13], 4
      %s87 = int_to_ptr.vmem [resolvable:$true] %s86
      %92 = dma.hbm_to_vmem [thread:$0]  %s6, 256, %s87, [#allocation14], 128, 128, 8
    $region25: #{tpu_custom_call.1} parent=1 // pred_fallthru
      _
    // Predicated region
    $region26: #{tpu_custom_call.1} parent=1 // pred_check
      _
    $region27: #{tpu_custom_call.1} parent=1 // pred_check_branch
      %94 = sbr.rel (0) target = $region29
    $region28: #{tpu_custom_call.1} parent=1 // pred_region
      %95 = dma.done [#allocation5], 128
    $region29: #{tpu_custom_call.1} parent=1 // pred_fallthru
      _
    // Predicated region
    $region30: #{tpu_custom_call.1} parent=1 // pred_check
      _
    $region31: #{tpu_custom_call.1} parent=1 // pred_check_branch
      %97 = sbr.rel (0) target = $region33
    $region32: #{tpu_custom_call.1} parent=1 // pred_region
      %98 = dma.done [#allocation8], 1024
    $region33: #{tpu_custom_call.1} parent=1 // pred_fallthru
      _
    // Predicated region
    $region34: #{tpu_custom_call.1} parent=1 // pred_check
      _
    $region35: #{tpu_custom_call.1} parent=1 // pred_check_branch
      %100 = sbr.rel (0) target = $region37
    $region36: #{tpu_custom_call.1} parent=1 // pred_region
      %101 = dma.done [#allocation8], 1024
    $region37: #{tpu_custom_call.1} parent=1 // pred_fallthru
      _
    // Predicated region
    $region38: #{tpu_custom_call.1} parent=1 // pred_check
      _
    $region39: #{tpu_custom_call.1} parent=1 // pred_check_branch
      %103 = sbr.rel (0) target = $region41
    $region40: #{tpu_custom_call.1} parent=1 // pred_region
      %104 = dma.done [#allocation11], 1024
    $region41: #{tpu_custom_call.1} parent=1 // pred_fallthru
      _
    // Predicated region
    $region42: #{tpu_custom_call.1} parent=1 // pred_check
      _
    $region43: #{tpu_custom_call.1} parent=1 // pred_check_branch
      %106 = sbr.rel (0) target = $region45
    $region44: #{tpu_custom_call.1} parent=1 // pred_region
      %107 = dma.done [#allocation11], 1024
    $region45: #{tpu_custom_call.1} parent=1 // pred_fallthru
      _
    // Predicated region
    $region46: #{tpu_custom_call.1} parent=1 // pred_check
      _
    $region47: #{tpu_custom_call.1} parent=1 // pred_check_branch
      %109 = sbr.rel (0) target = $region49
    $region48: #{tpu_custom_call.1} parent=1 // pred_region
      %110 = dma.done [#allocation14], 256
    $region49: #{tpu_custom_call.1} parent=1 // pred_fallthru
      _
    %v112 = vld [vmem:[#allocation13] sm:$0xff]
    %v113 = vld [vmem:[#allocation13 + $0x8] sm:$0xff]
    %v114 = vld [vmem:[#allocation7] sm:$0xf]
    %v115 = vld [vmem:[#allocation7 + $0x4] sm:$0xf]
    %v116 = vld [vmem:[#allocation7 + $0x8] sm:$0xf]
    %v117 = vld [vmem:[#allocation7 + $0xc] sm:$0xf]
    %v118 = vld [vmem:[#allocation7 + $0x10] sm:$0xf]
    %v119 = vld [vmem:[#allocation7 + $0x14] sm:$0xf]
    %v120 = vld [vmem:[#allocation7 + $0x18] sm:$0xf]
    %v121 = vld [vmem:[#allocation7 + $0x1c] sm:$0xf]
    %v122 = vld [vmem:[#allocation7 + $0x20] sm:$0xf]
    %v123 = vld [vmem:[#allocation7 + $0x24] sm:$0xf]
    %v124 = vld [vmem:[#allocation7 + $0x28] sm:$0xf]
    %v125 = vld [vmem:[#allocation7 + $0x2c] sm:$0xf]
    %v126 = vld [vmem:[#allocation7 + $0x30] sm:$0xf]
    %v127 = vld [vmem:[#allocation7 + $0x34] sm:$0xf]
    %v128 = vld [vmem:[#allocation7 + $0x38] sm:$0xf]
    %v129 = vld [vmem:[#allocation7 + $0x3c] sm:$0xf]
    %v130 = vld [vmem:[#allocation9] sm:$0xf]
    %v131 = vld [vmem:[#allocation9 + $0x4] sm:$0xf]
    %v132 = vld [vmem:[#allocation9 + $0x8] sm:$0xf]
    %v133 = vld [vmem:[#allocation9 + $0xc] sm:$0xf]
    %v134 = vld [vmem:[#allocation9 + $0x10] sm:$0xf]
    %v135 = vld [vmem:[#allocation9 + $0x14] sm:$0xf]
    %v136 = vld [vmem:[#allocation9 + $0x18] sm:$0xf]
    %v137 = vld [vmem:[#allocation9 + $0x1c] sm:$0xf]
    %v138 = vld [vmem:[#allocation9 + $0x20] sm:$0xf]
    %v139 = vld [vmem:[#allocation9 + $0x24] sm:$0xf]
    %v140 = vld [vmem:[#allocation9 + $0x28] sm:$0xf]
    %v141 = vld [vmem:[#allocation9 + $0x2c] sm:$0xf]
    %v142 = vld [vmem:[#allocation9 + $0x30] sm:$0xf]
    %v143 = vld [vmem:[#allocation9 + $0x34] sm:$0xf]
    %v144 = vld [vmem:[#allocation9 + $0x38] sm:$0xf]
    %v145 = vld [vmem:[#allocation9 + $0x3c] sm:$0xf]
    %v146 = vld [vmem:[#allocation10] sm:$0xf]
    %v147 = vld [vmem:[#allocation10 + $0x4] sm:$0xf]
    %v148 = vld [vmem:[#allocation10 + $0x8] sm:$0xf]
    %v149 = vld [vmem:[#allocation10 + $0xc] sm:$0xf]
    %v150 = vld [vmem:[#allocation10 + $0x10] sm:$0xf]
    %v151 = vld [vmem:[#allocation10 + $0x14] sm:$0xf]
    %v152 = vld [vmem:[#allocation10 + $0x18] sm:$0xf]
    %v153 = vld [vmem:[#allocation10 + $0x1c] sm:$0xf]
    %v154 = vld [vmem:[#allocation10 + $0x20] sm:$0xf]
    %v155 = vld [vmem:[#allocation10 + $0x24] sm:$0xf]
    %v156 = vld [vmem:[#allocation10 + $0x28] sm:$0xf]
    %v157 = vld [vmem:[#allocation10 + $0x2c] sm:$0xf]
    %v158 = vld [vmem:[#allocation10 + $0x30] sm:$0xf]
    %v159 = vld [vmem:[#allocation10 + $0x34] sm:$0xf]
    %v160 = vld [vmem:[#allocation10 + $0x38] sm:$0xf]
    %v161 = vld [vmem:[#allocation10 + $0x3c] sm:$0xf]
    %v162 = vld [vmem:[#allocation12] sm:$0xf]
    %v163 = vld [vmem:[#allocation12 + $0x4] sm:$0xf]
    %v164 = vld [vmem:[#allocation12 + $0x8] sm:$0xf]
    %v165 = vld [vmem:[#allocation12 + $0xc] sm:$0xf]
    %v166 = vld [vmem:[#allocation12 + $0x10] sm:$0xf]
    %v167 = vld [vmem:[#allocation12 + $0x14] sm:$0xf]
    %v168 = vld [vmem:[#allocation12 + $0x18] sm:$0xf]
    %v169 = vld [vmem:[#allocation12 + $0x1c] sm:$0xf]
    %v170 = vld [vmem:[#allocation12 + $0x20] sm:$0xf]
    %v171 = vld [vmem:[#allocation12 + $0x24] sm:$0xf]
    %v172 = vld [vmem:[#allocation12 + $0x28] sm:$0xf]
    %v173 = vld [vmem:[#allocation12 + $0x2c] sm:$0xf]
    %v174 = vld [vmem:[#allocation12 + $0x30] sm:$0xf]
    %v175 = vld [vmem:[#allocation12 + $0x34] sm:$0xf]
    %v176 = vld [vmem:[#allocation12 + $0x38] sm:$0xf]
    %v177 = vld [vmem:[#allocation12 + $0x3c] sm:$0xf]
    %s178 = sld [smem:[#allocation3]]
    %s179 = sld [smem:[#allocation3 + $0x1]]
    %s180 = sld [smem:[#allocation3 + $0x2]]
    %v181 = vld [vmem:[#allocation4] sm:$0xf]
    %v182 = vld [vmem:[#allocation4 + $0x4] sm:$0xf]
    %v183 = vlaneseq
    %v184 = vshrl.u32 %v183, 7
    %v185 = vsub.s32 0, %v184
    %v186 = vrot.slane %v112, %v185
    %v189 = vunpack.c.l.b16 %v181
    %v190 = vunpack.c.l.b16 %v182
    %v191 = vpack.c.b16 %v190, %v189
    %v209 = vunpack.c.l.b16 %v114
    %v210 = vunpack.c.l.b16 %v115
    %v211 = vunpack.c.l.b16 %v116
    %v212 = vunpack.c.l.b16 %v117
    %v213 = vunpack.c.l.b16 %v118
    %v214 = vunpack.c.l.b16 %v119
    %v215 = vunpack.c.l.b16 %v120
    %v216 = vunpack.c.l.b16 %v121
    %v217 = vunpack.c.l.b16 %v122
    %v218 = vunpack.c.l.b16 %v123
    %v219 = vunpack.c.l.b16 %v124
    %v220 = vunpack.c.l.b16 %v125
    %v221 = vunpack.c.l.b16 %v126
    %v222 = vunpack.c.l.b16 %v127
    %v223 = vunpack.c.l.b16 %v128
    %v224 = vunpack.c.l.b16 %v129
    %v225 = vpack.c.b16 %v210, %v209
    %v226 = vpack.c.b16 %v212, %v211
    %v227 = vpack.c.b16 %v214, %v213
    %v228 = vpack.c.b16 %v216, %v215
    %v229 = vpack.c.b16 %v218, %v217
    %v230 = vpack.c.b16 %v220, %v219
    %v231 = vpack.c.b16 %v222, %v221
    %v232 = vpack.c.b16 %v224, %v223
    %241 = vmatprep.subr.bf16.mxu0 0
    %242 = vmatpush1.bf16.msra.mxu0 %v232
    %243 = vmatprep.subr.bf16.mxu0 0
    %244 = vmatpush1.bf16.msra.mxu0 %v231
    %245 = vmatprep.subr.bf16.mxu0 0
    %246 = vmatpush1.bf16.msra.mxu0 %v230
    %247 = vmatprep.subr.bf16.mxu0 0
    %248 = vmatpush1.bf16.msra.mxu0 %v229
    %249 = vmatprep.subr.bf16.mxu0 0
    %250 = vmatpush1.bf16.msra.mxu0 %v228
    %251 = vmatprep.subr.bf16.mxu0 0
    %252 = vmatpush1.bf16.msra.mxu0 %v227
    %253 = vmatprep.subr.bf16.mxu0 0
    %254 = vmatpush1.bf16.msra.mxu0 %v226
    %255 = vmatprep.subr.bf16.mxu0 0
    %256 = vmatpush1.bf16.msra.mxu0 %v225
    %257 = vmatprep.subr.bf16.mxu0 0
    %258 = vmatpush2.bf16.msra.mxu0 0
    %259 = vmatprep.subr.bf16.mxu0 0
    %260 = vmatpush2.bf16.msra.mxu0 0
    %261 = vmatprep.subr.bf16.mxu0 0
    %262 = vmatpush2.bf16.msra.mxu0 0
    %263 = vmatprep.subr.bf16.mxu0 0
    %264 = vmatpush2.bf16.msra.mxu0 0
    %265 = vmatprep.subr.bf16.mxu0 0
    %266 = vmatpush2.bf16.msra.mxu0 0
    %267 = vmatprep.subr.bf16.mxu0 0
    %268 = vmatpush2.bf16.msra.mxu0 0
    %269 = vmatprep.subr.bf16.mxu0 0
    %270 = vmatpush2.bf16.msra.mxu0 0
    %271 = vmatprep.subr.bf16.mxu0 0
    %272 = vmatpush2.bf16.msra.mxu0 0
    %273 = vmatprep.mubr.bf16.mxu0 0
    %274 = vmatmul.mubr.bf16.gmra.mxu0 %v191
    %v275 = vpop.f32.mrf.mxu0
    %v276 = vadd.f32 %v186, %v275
    %v277 = vpop.f32.mrf.mxu0
    %v278 = vpop.f32.mrf.mxu0
    %v279 = vadd.f32 %v186, %v278
    %v280 = vpop.f32.mrf.mxu0
    %281 = vdwg.mxu0
    %282 = vadd.xlane.f32.xlu0 %v276
    %v283 = vpop.xlane.xlu0 %282
    %284 = vadd.xlane.f32.xlu0 %v279
    %v285 = vpop.xlane.xlu0 %284
    %v286 = vmul.f32 %v283, 0.03125
    %v287 = vmul.f32 %v285, 0.03125
    %v288 = vsub.f32 %v276, %v286
    %v289 = vsub.f32 %v279, %v287
    %v290 = vmul.f32 %v288, %v288
    %v291 = vmul.f32 %v289, %v289
    %292 = vadd.xlane.f32.xlu0 %v290
    %v293 = vpop.xlane.xlu0 %292
    %294 = vadd.xlane.f32.xlu0 %v291
    %v295 = vpop.xlane.xlu0 %294
    %v296 = vmul.f32 %v286, %v286
    %v297 = vmul.f32 %v287, %v287
    %v298 = vmul.f32 %v296, 96.0
    %v299 = vmul.f32 %v297, 96.0
    %v300 = vsub.f32 %v293, %v298
    %v301 = vsub.f32 %v295, %v299
    %v302 = vmul.f32 %v300, 0.03125
    %v303 = vmul.f32 %v301, 0.03125
    %v304 = vadd.f32 %v302, 1e-05
    %v305 = vadd.f32 %v303, 1e-05
    %v306 = vrsqrt.pop %v304
    %v307 = vrsqrt.pop %v305
    %v308 = vmul.f32 %v288, %v306
    %v309 = vmul.f32 %v289, %v307
    %v310 = vlaneseq
    %v311 = vshrl.u32 %v310, 7
    %v312 = vsub.s32 1, %v311
    %v313 = vrot.slane %v112, %v312
    %v314 = vmul.f32 %v308, %v313
    %v315 = vmul.f32 %v309, %v313
    %v316 = vlaneseq
    %v317 = vshrl.u32 %v316, 7
    %v318 = vsub.s32 2, %v317
    %v319 = vrot.slane %v112, %v318
    %v320 = vadd.f32 %v314, %v319
    %v321 = vadd.f32 %v315, %v319
    %vm322 = vcmp.ge.f32.partialorder %v320, 0.0
    %vm323 = vcmp.ge.f32.partialorder %v321, 0.0
    %v324 = vstv %s178
    %v325 = vmul.f32 %v324, %v320
    %v326 = vmul.f32 %v324, %v321
    %v327 = vsel %vm322, %v320, %v325
    %v328 = vsel %vm323, %v321, %v326
    %v329 = vpack.c.bf16 %v328, %v327
    %v330 = vlaneseq
    %v331 = vshrl.u32 %v330, 7
    %v332 = vsub.s32 3, %v331
    %v333 = vrot.slane %v112, %v332
    %v350 = vunpack.c.l.b16 %v130
    %v351 = vunpack.c.l.b16 %v131
    %v352 = vunpack.c.l.b16 %v132
    %v353 = vunpack.c.l.b16 %v133
    %v354 = vunpack.c.l.b16 %v134
    %v355 = vunpack.c.l.b16 %v135
    %v356 = vunpack.c.l.b16 %v136
    %v357 = vunpack.c.l.b16 %v137
    %v358 = vunpack.c.l.b16 %v138
    %v359 = vunpack.c.l.b16 %v139
    %v360 = vunpack.c.l.b16 %v140
    %v361 = vunpack.c.l.b16 %v141
    %v362 = vunpack.c.l.b16 %v142
    %v363 = vunpack.c.l.b16 %v143
    %v364 = vunpack.c.l.b16 %v144
    %v365 = vunpack.c.l.b16 %v145
    %v366 = vpack.c.b16 %v351, %v350
    %v367 = vpack.c.b16 %v353, %v352
    %v368 = vpack.c.b16 %v355, %v354
    %v369 = vpack.c.b16 %v357, %v356
    %v370 = vpack.c.b16 %v359, %v358
    %v371 = vpack.c.b16 %v361, %v360
    %v372 = vpack.c.b16 %v363, %v362
    %v373 = vpack.c.b16 %v365, %v364
    %382 = vmatprep.subr.bf16.mxu0 0
    %383 = vmatpush1.bf16.msra.mxu0 %v373
    %384 = vmatprep.subr.bf16.mxu0 0
    %385 = vmatpush1.bf16.msra.mxu0 %v372
    %386 = vmatprep.subr.bf16.mxu0 0
    %387 = vmatpush1.bf16.msra.mxu0 %v371
    %388 = vmatprep.subr.bf16.mxu0 0
    %389 = vmatpush1.bf16.msra.mxu0 %v370
    %390 = vmatprep.subr.bf16.mxu0 0
    %391 = vmatpush1.bf16.msra.mxu0 %v369
    %392 = vmatprep.subr.bf16.mxu0 0
    %393 = vmatpush1.bf16.msra.mxu0 %v368
    %394 = vmatprep.subr.bf16.mxu0 0
    %395 = vmatpush1.bf16.msra.mxu0 %v367
    %396 = vmatprep.subr.bf16.mxu0 0
    %397 = vmatpush1.bf16.msra.mxu0 %v366
    %398 = vmatprep.subr.bf16.mxu0 0
    %399 = vmatpush2.bf16.msra.mxu0 0
    %400 = vmatprep.subr.bf16.mxu0 0
    %401 = vmatpush2.bf16.msra.mxu0 0
    %402 = vmatprep.subr.bf16.mxu0 0
    %403 = vmatpush2.bf16.msra.mxu0 0
    %404 = vmatprep.subr.bf16.mxu0 0
    %405 = vmatpush2.bf16.msra.mxu0 0
    %406 = vmatprep.subr.bf16.mxu0 0
    %407 = vmatpush2.bf16.msra.mxu0 0
    %408 = vmatprep.subr.bf16.mxu0 0
    %409 = vmatpush2.bf16.msra.mxu0 0
    %410 = vmatprep.subr.bf16.mxu0 0
    %411 = vmatpush2.bf16.msra.mxu0 0
    %412 = vmatprep.subr.bf16.mxu0 0
    %413 = vmatpush2.bf16.msra.mxu0 0
    %414 = vmatprep.mubr.bf16.mxu0 0
    %415 = vmatmul.mubr.bf16.gmra.mxu0 %v329
    %v416 = vpop.f32.mrf.mxu0
    %v417 = vadd.f32 %v333, %v416
    %v418 = vpop.f32.mrf.mxu0
    %v419 = vpop.f32.mrf.mxu0
    %v420 = vadd.f32 %v333, %v419
    %v421 = vpop.f32.mrf.mxu0
    %422 = vdwg.mxu0
    %423 = vadd.xlane.f32.xlu0 %v417
    %v424 = vpop.xlane.xlu0 %423
    %425 = vadd.xlane.f32.xlu0 %v420
    %v426 = vpop.xlane.xlu0 %425
    %v427 = vmul.f32 %v424, 0.03125
    %v428 = vmul.f32 %v426, 0.03125
    %v429 = vsub.f32 %v417, %v427
    %v430 = vsub.f32 %v420, %v428
    %v431 = vmul.f32 %v429, %v429
    %v432 = vmul.f32 %v430, %v430
    %433 = vadd.xlane.f32.xlu0 %v431
    %v434 = vpop.xlane.xlu0 %433
    %435 = vadd.xlane.f32.xlu0 %v432
    %v436 = vpop.xlane.xlu0 %435
    %v437 = vmul.f32 %v427, %v427
    %v438 = vmul.f32 %v428, %v428
    %v439 = vmul.f32 %v437, 96.0
    %v440 = vmul.f32 %v438, 96.0
    %v441 = vsub.f32 %v434, %v439
    %v442 = vsub.f32 %v436, %v440
    %v443 = vmul.f32 %v441, 0.03125
    %v444 = vmul.f32 %v442, 0.03125
    %v445 = vadd.f32 %v443, 1e-05
    %v446 = vadd.f32 %v444, 1e-05
    %v447 = vrsqrt.pop %v445
    %v448 = vrsqrt.pop %v446
    %v449 = vmul.f32 %v429, %v447
    %v450 = vmul.f32 %v430, %v448
    %v451 = vlaneseq
    %v452 = vshrl.u32 %v451, 7
    %v453 = vsub.s32 4, %v452
    %v454 = vrot.slane %v112, %v453
    %v455 = vmul.f32 %v449, %v454
    %v456 = vmul.f32 %v450, %v454
    %v457 = vlaneseq
    %v458 = vshrl.u32 %v457, 7
    %v459 = vsub.s32 5, %v458
    %v460 = vrot.slane %v112, %v459
    %v461 = vadd.f32 %v455, %v460
    %v462 = vadd.f32 %v456, %v460
    %vm463 = vcmp.ge.f32.partialorder %v461, 0.0
    %vm464 = vcmp.ge.f32.partialorder %v462, 0.0
    %v465 = vstv %s179
    %v466 = vmul.f32 %v465, %v461
    %v467 = vmul.f32 %v465, %v462
    %v468 = vsel %vm463, %v461, %v466
    %v469 = vsel %vm464, %v462, %v467
    %v470 = vpack.c.bf16 %v469, %v468
    %v471 = vlaneseq
    %v472 = vshrl.u32 %v471, 7
    %v473 = vsub.s32 6, %v472
    %v474 = vrot.slane %v112, %v473
    %v491 = vunpack.c.l.b16 %v146
    %v492 = vunpack.c.l.b16 %v147
    %v493 = vunpack.c.l.b16 %v148
    %v494 = vunpack.c.l.b16 %v149
    %v495 = vunpack.c.l.b16 %v150
    %v496 = vunpack.c.l.b16 %v151
    %v497 = vunpack.c.l.b16 %v152
    %v498 = vunpack.c.l.b16 %v153
    %v499 = vunpack.c.l.b16 %v154
    %v500 = vunpack.c.l.b16 %v155
    %v501 = vunpack.c.l.b16 %v156
    %v502 = vunpack.c.l.b16 %v157
    %v503 = vunpack.c.l.b16 %v158
    %v504 = vunpack.c.l.b16 %v159
    %v505 = vunpack.c.l.b16 %v160
    %v506 = vunpack.c.l.b16 %v161
    %v507 = vpack.c.b16 %v492, %v491
    %v508 = vpack.c.b16 %v494, %v493
    %v509 = vpack.c.b16 %v496, %v495
    %v510 = vpack.c.b16 %v498, %v497
    %v511 = vpack.c.b16 %v500, %v499
    %v512 = vpack.c.b16 %v502, %v501
    %v513 = vpack.c.b16 %v504, %v503
    %v514 = vpack.c.b16 %v506, %v505
    %523 = vmatprep.subr.bf16.mxu0 0
    %524 = vmatpush1.bf16.msra.mxu0 %v514
    %525 = vmatprep.subr.bf16.mxu0 0
    %526 = vmatpush1.bf16.msra.mxu0 %v513
    %527 = vmatprep.subr.bf16.mxu0 0
    %528 = vmatpush1.bf16.msra.mxu0 %v512
    %529 = vmatprep.subr.bf16.mxu0 0
    %530 = vmatpush1.bf16.msra.mxu0 %v511
    %531 = vmatprep.subr.bf16.mxu0 0
    %532 = vmatpush1.bf16.msra.mxu0 %v510
    %533 = vmatprep.subr.bf16.mxu0 0
    %534 = vmatpush1.bf16.msra.mxu0 %v509
    %535 = vmatprep.subr.bf16.mxu0 0
    %536 = vmatpush1.bf16.msra.mxu0 %v508
    %537 = vmatprep.subr.bf16.mxu0 0
    %538 = vmatpush1.bf16.msra.mxu0 %v507
    %539 = vmatprep.subr.bf16.mxu0 0
    %540 = vmatpush2.bf16.msra.mxu0 0
    %541 = vmatprep.subr.bf16.mxu0 0
    %542 = vmatpush2.bf16.msra.mxu0 0
    %543 = vmatprep.subr.bf16.mxu0 0
    %544 = vmatpush2.bf16.msra.mxu0 0
    %545 = vmatprep.subr.bf16.mxu0 0
    %546 = vmatpush2.bf16.msra.mxu0 0
    %547 = vmatprep.subr.bf16.mxu0 0
    %548 = vmatpush2.bf16.msra.mxu0 0
    %549 = vmatprep.subr.bf16.mxu0 0
    %550 = vmatpush2.bf16.msra.mxu0 0
    %551 = vmatprep.subr.bf16.mxu0 0
    %552 = vmatpush2.bf16.msra.mxu0 0
    %553 = vmatprep.subr.bf16.mxu0 0
    %554 = vmatpush2.bf16.msra.mxu0 0
    %555 = vmatprep.mubr.bf16.mxu0 0
    %556 = vmatmul.mubr.bf16.gmra.mxu0 %v470
    %v557 = vpop.f32.mrf.mxu0
    %v558 = vadd.f32 %v474, %v557
    %v559 = vpop.f32.mrf.mxu0
    %v560 = vpop.f32.mrf.mxu0
    %v561 = vadd.f32 %v474, %v560
    %v562 = vpop.f32.mrf.mxu0
    %563 = vdwg.mxu0
    %564 = vadd.xlane.f32.xlu0 %v558
    %v565 = vpop.xlane.xlu0 %564
    %566 = vadd.xlane.f32.xlu0 %v561
    %v567 = vpop.xlane.xlu0 %566
    %v568 = vmul.f32 %v565, 0.03125
    %v569 = vmul.f32 %v567, 0.03125
    %v570 = vsub.f32 %v558, %v568
    %v571 = vsub.f32 %v561, %v569
    %v572 = vmul.f32 %v570, %v570
    %v573 = vmul.f32 %v571, %v571
    %574 = vadd.xlane.f32.xlu0 %v572
    %v575 = vpop.xlane.xlu0 %574
    %576 = vadd.xlane.f32.xlu0 %v573
    %v577 = vpop.xlane.xlu0 %576
    %v578 = vmul.f32 %v568, %v568
    %v579 = vmul.f32 %v569, %v569
    %v580 = vmul.f32 %v578, 96.0
    %v581 = vmul.f32 %v579, 96.0
    %v582 = vsub.f32 %v575, %v580
    %v583 = vsub.f32 %v577, %v581
    %v584 = vmul.f32 %v582, 0.03125
    %v585 = vmul.f32 %v583, 0.03125
    %v586 = vadd.f32 %v584, 1e-05
    %v587 = vadd.f32 %v585, 1e-05
    %v588 = vrsqrt.pop %v586
    %v589 = vrsqrt.pop %v587
    %v590 = vmul.f32 %v570, %v588
    %v591 = vmul.f32 %v571, %v589
    %v592 = vlaneseq
    %v593 = vshrl.u32 %v592, 7
    %v594 = vsub.s32 7, %v593
    %v595 = vrot.slane %v112, %v594
    %v596 = vmul.f32 %v590, %v595
    %v597 = vmul.f32 %v591, %v595
    %v598 = vlaneseq
    %v599 = vshrl.u32 %v598, 7
    %v600 = vsub.s32 0, %v599
    %v601 = vrot.slane %v113, %v600
    %v602 = vadd.f32 %v596, %v601
    %v603 = vadd.f32 %v597, %v601
    %vm604 = vcmp.ge.f32.partialorder %v602, 0.0
    %vm605 = vcmp.ge.f32.partialorder %v603, 0.0
    %v606 = vstv %s180
    %v607 = vmul.f32 %v606, %v602
    %v608 = vmul.f32 %v606, %v603
    %v609 = vsel %vm604, %v602, %v607
    %v610 = vsel %vm605, %v603, %v608
    %v611 = vlaneseq
    %v612 = vshrl.u32 %v611, 7
    %v613 = vsub.s32 1, %v612
    %v614 = vrot.slane %v113, %v613
    %v631 = vunpack.c.l.b16 %v162
    %v632 = vunpack.c.l.b16 %v163
    %v633 = vunpack.c.l.b16 %v164
    %v634 = vunpack.c.l.b16 %v165
    %v635 = vunpack.c.l.b16 %v166
    %v636 = vunpack.c.l.b16 %v167
    %v637 = vunpack.c.l.b16 %v168
    %v638 = vunpack.c.l.b16 %v169
    %v639 = vunpack.c.l.b16 %v170
    %v640 = vunpack.c.l.b16 %v171
    %v641 = vunpack.c.l.b16 %v172
    %v642 = vunpack.c.l.b16 %v173
    %v643 = vunpack.c.l.b16 %v174
    %v644 = vunpack.c.l.b16 %v175
    %v645 = vunpack.c.l.b16 %v176
    %v646 = vunpack.c.l.b16 %v177
    %v647 = vpack.c.b16 %v632, %v631
    %v648 = vpack.c.b16 %v634, %v633
    %v649 = vpack.c.b16 %v636, %v635
    %v650 = vpack.c.b16 %v638, %v637
    %v651 = vpack.c.b16 %v640, %v639
    %v652 = vpack.c.b16 %v642, %v641
    %v653 = vpack.c.b16 %v644, %v643
    %v654 = vpack.c.b16 %v646, %v645
    %663 = vmatprep.subr.bf16.mxu0 0
    %664 = vmatpush1.bf16.msra.mxu0 %v654
    %665 = vmatprep.subr.bf16.mxu0 0
    %666 = vmatpush1.bf16.msra.mxu0 %v653
    %667 = vmatprep.subr.bf16.mxu0 0
    %668 = vmatpush1.bf16.msra.mxu0 %v652
    %669 = vmatprep.subr.bf16.mxu0 0
    %670 = vmatpush1.bf16.msra.mxu0 %v651
    %671 = vmatprep.subr.bf16.mxu0 0
    %672 = vmatpush1.bf16.msra.mxu0 %v650
    %673 = vmatprep.subr.bf16.mxu0 0
    %674 = vmatpush1.bf16.msra.mxu0 %v649
    %675 = vmatprep.subr.bf16.mxu0 0
    %676 = vmatpush1.bf16.msra.mxu0 %v648
    %677 = vmatprep.subr.bf16.mxu0 0
    %678 = vmatpush1.bf16.msra.mxu0 %v647
    %679 = vmatprep.subr.bf16.mxu0 0
    %680 = vmatpush2.bf16.msra.mxu0 0
    %681 = vmatprep.subr.bf16.mxu0 0
    %682 = vmatpush2.bf16.msra.mxu0 0
    %683 = vmatprep.subr.bf16.mxu0 0
    %684 = vmatpush2.bf16.msra.mxu0 0
    %685 = vmatprep.subr.bf16.mxu0 0
    %686 = vmatpush2.bf16.msra.mxu0 0
    %687 = vmatprep.subr.bf16.mxu0 0
    %688 = vmatpush2.bf16.msra.mxu0 0
    %689 = vmatprep.subr.bf16.mxu0 0
    %690 = vmatpush2.bf16.msra.mxu0 0
    %691 = vmatprep.subr.bf16.mxu0 0
    %692 = vmatpush2.bf16.msra.mxu0 0
    %693 = vmatprep.subr.bf16.mxu0 0
    %694 = vmatpush2.bf16.msra.mxu0 0
    %695 = vmatprep.mubr.bf16.mxu0 0
    %696 = vmatmul.mubr.bf16.gmra.mxu0 %v191
    %v697 = vpop.f32.mrf.mxu0
    %v698 = vadd.f32 %v614, %v697
    %v699 = vpop.f32.mrf.mxu0
    %v700 = vpop.f32.mrf.mxu0
    %v701 = vadd.f32 %v614, %v700
    %v702 = vpop.f32.mrf.mxu0
    %703 = vdwg.mxu0
    %v704 = vadd.f32 %v609, %v698
    %v705 = vadd.f32 %v610, %v701
    %706 = vst [vmem:[#allocation15] sm:$0xff] %v704
    %707 = vst [vmem:[#allocation15 + $0x8] sm:$0xff] %v705
    // Predicated region
    $region50: #{tpu_custom_call.1} parent=1 // pred_check
      _
    $region51: #{tpu_custom_call.1} parent=1 // pred_check_branch
      %709 = sbr.rel (0) target = $region53
    $region52: #{tpu_custom_call.1} parent=1 // pred_region
      %s711 = ssub.s32 256, 256
      %712 = vsyncadd [#allocation6], %s711
      %s713 = sshll.u32 [#allocation15], 4
      %s714 = int_to_ptr.vmem [resolvable:$true] %s713
      %719 = dma.vmem_to_hbm [thread:$0]  %s714, 256, %s7, [#allocation6], 128, 128, 8
    $region53: #{tpu_custom_call.1} parent=1 // pred_fallthru
      _
    // Predicated region
    $region54: #{tpu_custom_call.1} parent=1 // pred_check
      _
    $region55: #{tpu_custom_call.1} parent=1 // pred_check_branch
      %721 = sbr.rel (0) target = $region57
    $region56: #{tpu_custom_call.1} parent=1 // pred_region
      %722 = dma.done [#allocation6], 256
    $region57: #{tpu_custom_call.1} parent=1 // pred_fallthru
      _
    %723 = vsyncpa [#allocation5], 1
    %724 = vsyncpa [#allocation8], 1
    %725 = vsyncpa [#allocation11], 1
    %726 = vsyncpa [#allocation14], 1
    %727 = vsyncpa [#allocation6], 1

// kernel: tpu_custom_call.1
$region0: #{tpu_custom_call.1}
  #allocation0 [shape = 'u32[]', space=smem, size = 0x4, offset = 0x4, fixed_abs, tag = 'smem constant byte address 0x4 - core index']
  #allocation1 [shape = 'u32[144,128]{1,0:T(1,128)}', space=vmem, size = 0x12000, scoped, tag = 'internal scratch']
  #allocation2 [shape = 's32[1]{0}', space=sflag, size = 0x4, scoped, tag = 'scoped memory for tpu_custom_call.1']
  #allocation3 [shape = 'u8[512]{0}', space=smem, size = 0x200, scoped, tag = 'prefetched SMEM operand 0']
  %s0 = inlined_call_operand.hbm [shape: f32[3], index: 0, kind: input, shape index: {}]
  %s1 = inlined_call_operand.hbm [shape: bf16[16,128], index: 1, kind: input, shape index: {}]
  %s2 = inlined_call_operand.hbm [shape: bf16[128,128], index: 2, kind: input, shape index: {}]
  %s3 = inlined_call_operand.hbm [shape: bf16[128,128], index: 3, kind: input, shape index: {}]
  %s4 = inlined_call_operand.hbm [shape: bf16[128,128], index: 4, kind: input, shape index: {}]
  %s5 = inlined_call_operand.hbm [shape: bf16[128,128], index: 5, kind: input, shape index: {}]
  %s6 = inlined_call_operand.hbm [shape: f32[16,128], index: 6, kind: input, shape index: {}]
  %s7 = inlined_call_operand.hbm [shape: f32[16,128], index: 7, kind: output, shape index: {}]
  %s8 = sld [smem:[#allocation0]]
  $region58: #{tpu_custom_call.1} parent=0
    _
  %s10 = ssub.s32 1, %s8
  %s11 = scalar_select 0, %s10, %s8
  %13 = dma.hbm_to_smem %s0, 16, [#allocation3], [#allocation2]
  %14 = dma.done [#allocation2], 16
  %15 = sfence
  $region1: #{tpu_custom_call.1} parent=0
    #allocation4 [shape = 'u8[4096]{0}', space=vmem, size = 0x1000, scoped, tag = 'input window, operand 1, single buffered']
    #allocation5 [shape = 's32[1]{0}', space=sflag, size = 0x4, scoped, tag = 'scoped memory for tpu_custom_call.1']
    #allocation6 [shape = 's32[1]{0}', space=sflag, size = 0x4, scoped, tag = 'scoped memory for tpu_custom_call.1']
    #allocation7 [shape = 'u8[32768]{0}', space=vmem, size = 0x8000, scoped, tag = 'input window, operand 2, single buffered']
    #allocation8 [shape = 's32[1]{0}', space=sflag, size = 0x4, scoped, tag = 'scoped memory for tpu_custom_call.1']
    #allocation9 [shape = 'u8[32768]{0}', space=vmem, size = 0x8000, scoped, tag = 'input window, operand 3, single buffered']
    #allocation10 [shape = 'u8[32768]{0}', space=vmem, size = 0x8000, scoped, tag = 'input window, operand 4, single buffered']
    #allocation11 [shape = 's32[1]{0}', space=sflag, size = 0x4, scoped, tag = 'scoped memory for tpu_custom_call.1']
    #allocation12 [shape = 'u8[32768]{0}', space=vmem, size = 0x8000, scoped, tag = 'input window, operand 5, single buffered']
    #allocation13 [shape = 'u8[8192]{0}', space=vmem, size = 0x2000, scoped, tag = 'input window, operand 6, single buffered']
    #allocation14 [shape = 's32[1]{0}', space=sflag, size = 0x4, scoped, tag = 'scoped memory for tpu_custom_call.1']
    #allocation15 [shape = 'u8[8192]{0}', space=vmem, size = 0x2000, scoped, tag = 'output window, operand 0, single buffered']
    %16 = vsyncpa [#allocation5], 0
    %17 = vsyncpa [#allocation8], 0
    %18 = vsyncpa [#allocation11], 0
    %19 = vsyncpa [#allocation14], 0
    %20 = vsyncpa [#allocation6], 0
    // Predicated region
    $region2: #{tpu_custom_call.1} parent=1 // pred_check
      _
    $region3: #{tpu_custom_call.1} parent=1 // pred_check_branch
      %22 = sbr.rel (0) target = $region5
    $region4: #{tpu_custom_call.1} parent=1 // pred_region
      %s24 = ssub.s32 128, 128
      %25 = vsyncadd [#allocation5], %s24
      %s26 = sshll.u32 [#allocation4], 4
      %s27 = int_to_ptr.vmem [resolvable:$true] %s26
      %32 = dma.hbm_to_vmem [thread:$0]  %s1, 128, %s27, [#allocation5], 64, 64, 4
    $region5: #{tpu_custom_call.1} parent=1 // pred_fallthru
      _
    // Predicated region
    $region6: #{tpu_custom_call.1} parent=1 // pred_check
      _
    $region7: #{tpu_custom_call.1} parent=1 // pred_check_branch
      %34 = sbr.rel (0) target = $region9
    $region8: #{tpu_custom_call.1} parent=1 // pred_region
      %s36 = ssub.s32 1024, 1024
      %37 = vsyncadd [#allocation8], %s36
      %s38 = sshll.u32 [#allocation7], 4
      %s39 = int_to_ptr.vmem [resolvable:$true] %s38
      %44 = dma.hbm_to_vmem [thread:$0]  %s2, 1024, %s39, [#allocation8], 64, 64, 4
    $region9: #{tpu_custom_call.1} parent=1 // pred_fallthru
      _
    // Predicated region
    $region10: #{tpu_custom_call.1} parent=1 // pred_check
      _
    $region11: #{tpu_custom_call.1} parent=1 // pred_check_branch
      %46 = sbr.rel (0) target = $region13
    $region12: #{tpu_custom_call.1} parent=1 // pred_region
      %s48 = ssub.s32 1024, 1024
      %49 = vsyncadd [#allocation8], %s48
      %s50 = sshll.u32 [#allocation9], 4
      %s51 = int_to_ptr.vmem [resolvable:$true] %s50
      %56 = dma.hbm_to_vmem [thread:$0]  %s3, 1024, %s51, [#allocation8], 64, 64, 4
    $region13: #{tpu_custom_call.1} parent=1 // pred_fallthru
      _
    // Predicated region
    $region14: #{tpu_custom_call.1} parent=1 // pred_check
      _
    $region15: #{tpu_custom_call.1} parent=1 // pred_check_branch
      %58 = sbr.rel (0) target = $region17
    $region16: #{tpu_custom_call.1} parent=1 // pred_region
      %s60 = ssub.s32 1024, 1024
      %61 = vsyncadd [#allocation11], %s60
      %s62 = sshll.u32 [#allocation10], 4
      %s63 = int_to_ptr.vmem [resolvable:$true] %s62
      %68 = dma.hbm_to_vmem [thread:$0]  %s4, 1024, %s63, [#allocation11], 64, 64, 4
    $region17: #{tpu_custom_call.1} parent=1 // pred_fallthru
      _
    // Predicated region
    $region18: #{tpu_custom_call.1} parent=1 // pred_check
      _
    $region19: #{tpu_custom_call.1} parent=1 // pred_check_branch
      %70 = sbr.rel (0) target = $region21
    $region20: #{tpu_custom_call.1} parent=1 // pred_region
      %s72 = ssub.s32 1024, 1024
      %73 = vsyncadd [#allocation11], %s72
      %s74 = sshll.u32 [#allocation12], 4
      %s75 = int_to_ptr.vmem [resolvable:$true] %s74
      %80 = dma.hbm_to_vmem [thread:$0]  %s5, 1024, %s75, [#allocation11], 64, 64, 4
    $region21: #{tpu_custom_call.1} parent=1 // pred_fallthru
      _
    // Predicated region
    $region22: #{tpu_custom_call.1} parent=1 // pred_check
      _
    $region23: #{tpu_custom_call.1} parent=1 // pred_check_branch
      %82 = sbr.rel (0) target = $region25
    $region24: #{tpu_custom_call.1} parent=1 // pred_region
      %s84 = ssub.s32 256, 256
      %85 = vsyncadd [#allocation14], %s84
      %s86 = sshll.u32 [#allocation13], 4
      %s87 = int_to_ptr.vmem [resolvable:$true] %s86
      %92 = dma.hbm_to_vmem [thread:$0]  %s6, 256, %s87, [#allocation14], 128, 128, 8
    $region25: #{tpu_custom_call.1} parent=1 // pred_fallthru
      _
    // Predicated region
    $region26: #{tpu_custom_call.1} parent=1 // pred_check
      _
    $region27: #{tpu_custom_call.1} parent=1 // pred_check_branch
      %94 = sbr.rel (0) target = $region29
    $region28: #{tpu_custom_call.1} parent=1 // pred_region
      %95 = dma.done [#allocation5], 128
    $region29: #{tpu_custom_call.1} parent=1 // pred_fallthru
      _
    // Predicated region
    $region30: #{tpu_custom_call.1} parent=1 // pred_check
      _
    $region31: #{tpu_custom_call.1} parent=1 // pred_check_branch
      %97 = sbr.rel (0) target = $region33
    $region32: #{tpu_custom_call.1} parent=1 // pred_region
      %98 = dma.done [#allocation8], 1024
    $region33: #{tpu_custom_call.1} parent=1 // pred_fallthru
      _
    // Predicated region
    $region34: #{tpu_custom_call.1} parent=1 // pred_check
      _
    $region35: #{tpu_custom_call.1} parent=1 // pred_check_branch
      %100 = sbr.rel (0) target = $region37
    $region36: #{tpu_custom_call.1} parent=1 // pred_region
      %101 = dma.done [#allocation8], 1024
    $region37: #{tpu_custom_call.1} parent=1 // pred_fallthru
      _
    // Predicated region
    $region38: #{tpu_custom_call.1} parent=1 // pred_check
      _
    $region39: #{tpu_custom_call.1} parent=1 // pred_check_branch
      %103 = sbr.rel (0) target = $region41
    $region40: #{tpu_custom_call.1} parent=1 // pred_region
      %104 = dma.done [#allocation11], 1024
    $region41: #{tpu_custom_call.1} parent=1 // pred_fallthru
      _
    // Predicated region
    $region42: #{tpu_custom_call.1} parent=1 // pred_check
      _
    $region43: #{tpu_custom_call.1} parent=1 // pred_check_branch
      %106 = sbr.rel (0) target = $region45
    $region44: #{tpu_custom_call.1} parent=1 // pred_region
      %107 = dma.done [#allocation11], 1024
    $region45: #{tpu_custom_call.1} parent=1 // pred_fallthru
      _
    // Predicated region
    $region46: #{tpu_custom_call.1} parent=1 // pred_check
      _
    $region47: #{tpu_custom_call.1} parent=1 // pred_check_branch
      %109 = sbr.rel (0) target = $region49
    $region48: #{tpu_custom_call.1} parent=1 // pred_region
      %110 = dma.done [#allocation14], 256
    $region49: #{tpu_custom_call.1} parent=1 // pred_fallthru
      _
    %v112 = vld [vmem:[#allocation13] sm:$0xff]
    %v113 = vld [vmem:[#allocation13 + $0x8] sm:$0xff]
    %v114 = vld [vmem:[#allocation7] sm:$0xf]
    %v115 = vld [vmem:[#allocation7 + $0x4] sm:$0xf]
    %v116 = vld [vmem:[#allocation7 + $0x8] sm:$0xf]
    %v117 = vld [vmem:[#allocation7 + $0xc] sm:$0xf]
    %v118 = vld [vmem:[#allocation7 + $0x10] sm:$0xf]
    %v119 = vld [vmem:[#allocation7 + $0x14] sm:$0xf]
    %v120 = vld [vmem:[#allocation7 + $0x18] sm:$0xf]
    %v121 = vld [vmem:[#allocation7 + $0x1c] sm:$0xf]
    %v122 = vld [vmem:[#allocation7 + $0x20] sm:$0xf]
    %v123 = vld [vmem:[#allocation7 + $0x24] sm:$0xf]
    %v124 = vld [vmem:[#allocation7 + $0x28] sm:$0xf]
    %v125 = vld [vmem:[#allocation7 + $0x2c] sm:$0xf]
    %v126 = vld [vmem:[#allocation7 + $0x30] sm:$0xf]
    %v127 = vld [vmem:[#allocation7 + $0x34] sm:$0xf]
    %v128 = vld [vmem:[#allocation7 + $0x38] sm:$0xf]
    %v129 = vld [vmem:[#allocation7 + $0x3c] sm:$0xf]
    %v130 = vld [vmem:[#allocation9] sm:$0xf]
    %v131 = vld [vmem:[#allocation9 + $0x4] sm:$0xf]
    %v132 = vld [vmem:[#allocation9 + $0x8] sm:$0xf]
    %v133 = vld [vmem:[#allocation9 + $0xc] sm:$0xf]
    %v134 = vld [vmem:[#allocation9 + $0x10] sm:$0xf]
    %v135 = vld [vmem:[#allocation9 + $0x14] sm:$0xf]
    %v136 = vld [vmem:[#allocation9 + $0x18] sm:$0xf]
    %v137 = vld [vmem:[#allocation9 + $0x1c] sm:$0xf]
    %v138 = vld [vmem:[#allocation9 + $0x20] sm:$0xf]
    %v139 = vld [vmem:[#allocation9 + $0x24] sm:$0xf]
    %v140 = vld [vmem:[#allocation9 + $0x28] sm:$0xf]
    %v141 = vld [vmem:[#allocation9 + $0x2c] sm:$0xf]
    %v142 = vld [vmem:[#allocation9 + $0x30] sm:$0xf]
    %v143 = vld [vmem:[#allocation9 + $0x34] sm:$0xf]
    %v144 = vld [vmem:[#allocation9 + $0x38] sm:$0xf]
    %v145 = vld [vmem:[#allocation9 + $0x3c] sm:$0xf]
    %v146 = vld [vmem:[#allocation10] sm:$0xf]
    %v147 = vld [vmem:[#allocation10 + $0x4] sm:$0xf]
    %v148 = vld [vmem:[#allocation10 + $0x8] sm:$0xf]
    %v149 = vld [vmem:[#allocation10 + $0xc] sm:$0xf]
    %v150 = vld [vmem:[#allocation10 + $0x10] sm:$0xf]
    %v151 = vld [vmem:[#allocation10 + $0x14] sm:$0xf]
    %v152 = vld [vmem:[#allocation10 + $0x18] sm:$0xf]
    %v153 = vld [vmem:[#allocation10 + $0x1c] sm:$0xf]
    %v154 = vld [vmem:[#allocation10 + $0x20] sm:$0xf]
    %v155 = vld [vmem:[#allocation10 + $0x24] sm:$0xf]
    %v156 = vld [vmem:[#allocation10 + $0x28] sm:$0xf]
    %v157 = vld [vmem:[#allocation10 + $0x2c] sm:$0xf]
    %v158 = vld [vmem:[#allocation10 + $0x30] sm:$0xf]
    %v159 = vld [vmem:[#allocation10 + $0x34] sm:$0xf]
    %v160 = vld [vmem:[#allocation10 + $0x38] sm:$0xf]
    %v161 = vld [vmem:[#allocation10 + $0x3c] sm:$0xf]
    %v162 = vld [vmem:[#allocation12] sm:$0xf]
    %v163 = vld [vmem:[#allocation12 + $0x4] sm:$0xf]
    %v164 = vld [vmem:[#allocation12 + $0x8] sm:$0xf]
    %v165 = vld [vmem:[#allocation12 + $0xc] sm:$0xf]
    %v166 = vld [vmem:[#allocation12 + $0x10] sm:$0xf]
    %v167 = vld [vmem:[#allocation12 + $0x14] sm:$0xf]
    %v168 = vld [vmem:[#allocation12 + $0x18] sm:$0xf]
    %v169 = vld [vmem:[#allocation12 + $0x1c] sm:$0xf]
    %v170 = vld [vmem:[#allocation12 + $0x20] sm:$0xf]
    %v171 = vld [vmem:[#allocation12 + $0x24] sm:$0xf]
    %v172 = vld [vmem:[#allocation12 + $0x28] sm:$0xf]
    %v173 = vld [vmem:[#allocation12 + $0x2c] sm:$0xf]
    %v174 = vld [vmem:[#allocation12 + $0x30] sm:$0xf]
    %v175 = vld [vmem:[#allocation12 + $0x34] sm:$0xf]
    %v176 = vld [vmem:[#allocation12 + $0x38] sm:$0xf]
    %v177 = vld [vmem:[#allocation12 + $0x3c] sm:$0xf]
    %s178 = sld [smem:[#allocation3]]
    %s179 = sld [smem:[#allocation3 + $0x1]]
    %s180 = sld [smem:[#allocation3 + $0x2]]
    %v181 = vld [vmem:[#allocation4] sm:$0xf]
    %v182 = vld [vmem:[#allocation4 + $0x4] sm:$0xf]
    %v183 = vlaneseq
    %v184 = vshrl.u32 %v183, 7
    %v185 = vsub.s32 0, %v184
    %v186 = vrot.slane %v112, %v185
    %v189 = vunpack.c.l.b16 %v181
    %v190 = vunpack.c.l.b16 %v182
    %v191 = vpack.c.b16 %v190, %v189
    %v209 = vunpack.c.l.b16 %v114
    %v210 = vunpack.c.l.b16 %v115
    %v211 = vunpack.c.l.b16 %v116
    %v212 = vunpack.c.l.b16 %v117
    %v213 = vunpack.c.l.b16 %v118
    %v214 = vunpack.c.l.b16 %v119
    %v215 = vunpack.c.l.b16 %v120
    %v216 = vunpack.c.l.b16 %v121
    %v217 = vunpack.c.l.b16 %v122
    %v218 = vunpack.c.l.b16 %v123
    %v219 = vunpack.c.l.b16 %v124
    %v220 = vunpack.c.l.b16 %v125
    %v221 = vunpack.c.l.b16 %v126
    %v222 = vunpack.c.l.b16 %v127
    %v223 = vunpack.c.l.b16 %v128
    %v224 = vunpack.c.l.b16 %v129
    %v225 = vpack.c.b16 %v210, %v209
    %v226 = vpack.c.b16 %v212, %v211
    %v227 = vpack.c.b16 %v214, %v213
    %v228 = vpack.c.b16 %v216, %v215
    %v229 = vpack.c.b16 %v218, %v217
    %v230 = vpack.c.b16 %v220, %v219
    %v231 = vpack.c.b16 %v222, %v221
    %v232 = vpack.c.b16 %v224, %v223
    %241 = vmatprep.subr.bf16.mxu0 0
    %242 = vmatpush1.bf16.msra.mxu0 %v232
    %243 = vmatprep.subr.bf16.mxu0 0
    %244 = vmatpush1.bf16.msra.mxu0 %v231
    %245 = vmatprep.subr.bf16.mxu0 0
    %246 = vmatpush1.bf16.msra.mxu0 %v230
    %247 = vmatprep.subr.bf16.mxu0 0
    %248 = vmatpush1.bf16.msra.mxu0 %v229
    %249 = vmatprep.subr.bf16.mxu0 0
    %250 = vmatpush1.bf16.msra.mxu0 %v228
    %251 = vmatprep.subr.bf16.mxu0 0
    %252 = vmatpush1.bf16.msra.mxu0 %v227
    %253 = vmatprep.subr.bf16.mxu0 0
    %254 = vmatpush1.bf16.msra.mxu0 %v226
    %255 = vmatprep.subr.bf16.mxu0 0
    %256 = vmatpush1.bf16.msra.mxu0 %v225
    %257 = vmatprep.subr.bf16.mxu0 0
    %258 = vmatpush2.bf16.msra.mxu0 0
    %259 = vmatprep.subr.bf16.mxu0 0
    %260 = vmatpush2.bf16.msra.mxu0 0
    %261 = vmatprep.subr.bf16.mxu0 0
    %262 = vmatpush2.bf16.msra.mxu0 0
    %263 = vmatprep.subr.bf16.mxu0 0
    %264 = vmatpush2.bf16.msra.mxu0 0
    %265 = vmatprep.subr.bf16.mxu0 0
    %266 = vmatpush2.bf16.msra.mxu0 0
    %267 = vmatprep.subr.bf16.mxu0 0
    %268 = vmatpush2.bf16.msra.mxu0 0
    %269 = vmatprep.subr.bf16.mxu0 0
    %270 = vmatpush2.bf16.msra.mxu0 0
    %271 = vmatprep.subr.bf16.mxu0 0
    %272 = vmatpush2.bf16.msra.mxu0 0
    %273 = vmatprep.mubr.bf16.mxu0 0
    %274 = vmatmul.mubr.bf16.gmra.mxu0 %v191
    %v275 = vpop.f32.mrf.mxu0
    %v276 = vadd.f32 %v186, %v275
    %v277 = vpop.f32.mrf.mxu0
    %v278 = vpop.f32.mrf.mxu0
    %v279 = vadd.f32 %v186, %v278
    %v280 = vpop.f32.mrf.mxu0
    %281 = vdwg.mxu0
    %282 = vadd.xlane.f32.xlu0 %v276
    %v283 = vpop.xlane.xlu0 %282
    %284 = vadd.xlane.f32.xlu0 %v279
    %v285 = vpop.xlane.xlu0 %284
    %v286 = vmul.f32 %v283, 0.03125
    %v287 = vmul.f32 %v285, 0.03125
    %v288 = vsub.f32 %v276, %v286
    %v289 = vsub.f32 %v279, %v287
    %v290 = vmul.f32 %v288, %v288
    %v291 = vmul.f32 %v289, %v289
    %292 = vadd.xlane.f32.xlu0 %v290
    %v293 = vpop.xlane.xlu0 %292
    %294 = vadd.xlane.f32.xlu0 %v291
    %v295 = vpop.xlane.xlu0 %294
    %v296 = vmul.f32 %v286, %v286
    %v297 = vmul.f32 %v287, %v287
    %v298 = vmul.f32 %v296, 96.0
    %v299 = vmul.f32 %v297, 96.0
    %v300 = vsub.f32 %v293, %v298
    %v301 = vsub.f32 %v295, %v299
    %v302 = vmul.f32 %v300, 0.03125
    %v303 = vmul.f32 %v301, 0.03125
    %v304 = vadd.f32 %v302, 1e-05
    %v305 = vadd.f32 %v303, 1e-05
    %v306 = vrsqrt.pop %v304
    %v307 = vrsqrt.pop %v305
    %v308 = vmul.f32 %v288, %v306
    %v309 = vmul.f32 %v289, %v307
    %v310 = vlaneseq
    %v311 = vshrl.u32 %v310, 7
    %v312 = vsub.s32 1, %v311
    %v313 = vrot.slane %v112, %v312
    %v314 = vmul.f32 %v308, %v313
    %v315 = vmul.f32 %v309, %v313
    %v316 = vlaneseq
    %v317 = vshrl.u32 %v316, 7
    %v318 = vsub.s32 2, %v317
    %v319 = vrot.slane %v112, %v318
    %v320 = vadd.f32 %v314, %v319
    %v321 = vadd.f32 %v315, %v319
    %vm322 = vcmp.ge.f32.partialorder %v320, 0.0
    %vm323 = vcmp.ge.f32.partialorder %v321, 0.0
    %v324 = vstv %s178
    %v325 = vmul.f32 %v324, %v320
    %v326 = vmul.f32 %v324, %v321
    %v327 = vsel %vm322, %v320, %v325
    %v328 = vsel %vm323, %v321, %v326
    %v329 = vpack.c.bf16 %v328, %v327
    %v330 = vlaneseq
    %v331 = vshrl.u32 %v330, 7
    %v332 = vsub.s32 3, %v331
    %v333 = vrot.slane %v112, %v332
    %v350 = vunpack.c.l.b16 %v130
    %v351 = vunpack.c.l.b16 %v131
    %v352 = vunpack.c.l.b16 %v132
    %v353 = vunpack.c.l.b16 %v133
    %v354 = vunpack.c.l.b16 %v134
    %v355 = vunpack.c.l.b16 %v135
    %v356 = vunpack.c.l.b16 %v136
    %v357 = vunpack.c.l.b16 %v137
    %v358 = vunpack.c.l.b16 %v138
    %v359 = vunpack.c.l.b16 %v139
    %v360 = vunpack.c.l.b16 %v140
    %v361 = vunpack.c.l.b16 %v141
    %v362 = vunpack.c.l.b16 %v142
    %v363 = vunpack.c.l.b16 %v143
    %v364 = vunpack.c.l.b16 %v144
    %v365 = vunpack.c.l.b16 %v145
    %v366 = vpack.c.b16 %v351, %v350
    %v367 = vpack.c.b16 %v353, %v352
    %v368 = vpack.c.b16 %v355, %v354
    %v369 = vpack.c.b16 %v357, %v356
    %v370 = vpack.c.b16 %v359, %v358
    %v371 = vpack.c.b16 %v361, %v360
    %v372 = vpack.c.b16 %v363, %v362
    %v373 = vpack.c.b16 %v365, %v364
    %382 = vmatprep.subr.bf16.mxu0 0
    %383 = vmatpush1.bf16.msra.mxu0 %v373
    %384 = vmatprep.subr.bf16.mxu0 0
    %385 = vmatpush1.bf16.msra.mxu0 %v372
    %386 = vmatprep.subr.bf16.mxu0 0
    %387 = vmatpush1.bf16.msra.mxu0 %v371
    %388 = vmatprep.subr.bf16.mxu0 0
    %389 = vmatpush1.bf16.msra.mxu0 %v370
    %390 = vmatprep.subr.bf16.mxu0 0
    %391 = vmatpush1.bf16.msra.mxu0 %v369
    %392 = vmatprep.subr.bf16.mxu0 0
    %393 = vmatpush1.bf16.msra.mxu0 %v368
    %394 = vmatprep.subr.bf16.mxu0 0
    %395 = vmatpush1.bf16.msra.mxu0 %v367
    %396 = vmatprep.subr.bf16.mxu0 0
    %397 = vmatpush1.bf16.msra.mxu0 %v366
    %398 = vmatprep.subr.bf16.mxu0 0
    %399 = vmatpush2.bf16.msra.mxu0 0
    %400 = vmatprep.subr.bf16.mxu0 0
    %401 = vmatpush2.bf16.msra.mxu0 0
    %402 = vmatprep.subr.bf16.mxu0 0
    %403 = vmatpush2.bf16.msra.mxu0 0
    %404 = vmatprep.subr.bf16.mxu0 0
    %405 = vmatpush2.bf16.msra.mxu0 0
    %406 = vmatprep.subr.bf16.mxu0 0
    %407 = vmatpush2.bf16.msra.mxu0 0
    %408 = vmatprep.subr.bf16.mxu0 0
    %409 = vmatpush2.bf16.msra.mxu0 0
    %410 = vmatprep.subr.bf16.mxu0 0
    %411 = vmatpush2.bf16.msra.mxu0 0
    %412 = vmatprep.subr.bf16.mxu0 0
    %413 = vmatpush2.bf16.msra.mxu0 0
    %414 = vmatprep.mubr.bf16.mxu0 0
    %415 = vmatmul.mubr.bf16.gmra.mxu0 %v329
    %v416 = vpop.f32.mrf.mxu0
    %v417 = vadd.f32 %v333, %v416
    %v418 = vpop.f32.mrf.mxu0
    %v419 = vpop.f32.mrf.mxu0
    %v420 = vadd.f32 %v333, %v419
    %v421 = vpop.f32.mrf.mxu0
    %422 = vdwg.mxu0
    %423 = vadd.xlane.f32.xlu0 %v417
    %v424 = vpop.xlane.xlu0 %423
    %425 = vadd.xlane.f32.xlu0 %v420
    %v426 = vpop.xlane.xlu0 %425
    %v427 = vmul.f32 %v424, 0.03125
    %v428 = vmul.f32 %v426, 0.03125
    %v429 = vsub.f32 %v417, %v427
    %v430 = vsub.f32 %v420, %v428
    %v431 = vmul.f32 %v429, %v429
    %v432 = vmul.f32 %v430, %v430
    %433 = vadd.xlane.f32.xlu0 %v431
    %v434 = vpop.xlane.xlu0 %433
    %435 = vadd.xlane.f32.xlu0 %v432
    %v436 = vpop.xlane.xlu0 %435
    %v437 = vmul.f32 %v427, %v427
    %v438 = vmul.f32 %v428, %v428
    %v439 = vmul.f32 %v437, 96.0
    %v440 = vmul.f32 %v438, 96.0
    %v441 = vsub.f32 %v434, %v439
    %v442 = vsub.f32 %v436, %v440
    %v443 = vmul.f32 %v441, 0.03125
    %v444 = vmul.f32 %v442, 0.03125
    %v445 = vadd.f32 %v443, 1e-05
    %v446 = vadd.f32 %v444, 1e-05
    %v447 = vrsqrt.pop %v445
    %v448 = vrsqrt.pop %v446
    %v449 = vmul.f32 %v429, %v447
    %v450 = vmul.f32 %v430, %v448
    %v451 = vlaneseq
    %v452 = vshrl.u32 %v451, 7
    %v453 = vsub.s32 4, %v452
    %v454 = vrot.slane %v112, %v453
    %v455 = vmul.f32 %v449, %v454
    %v456 = vmul.f32 %v450, %v454
    %v457 = vlaneseq
    %v458 = vshrl.u32 %v457, 7
    %v459 = vsub.s32 5, %v458
    %v460 = vrot.slane %v112, %v459
    %v461 = vadd.f32 %v455, %v460
    %v462 = vadd.f32 %v456, %v460
    %vm463 = vcmp.ge.f32.partialorder %v461, 0.0
    %vm464 = vcmp.ge.f32.partialorder %v462, 0.0
    %v465 = vstv %s179
    %v466 = vmul.f32 %v465, %v461
    %v467 = vmul.f32 %v465, %v462
    %v468 = vsel %vm463, %v461, %v466
    %v469 = vsel %vm464, %v462, %v467
    %v470 = vpack.c.bf16 %v469, %v468
    %v471 = vlaneseq
    %v472 = vshrl.u32 %v471, 7
    %v473 = vsub.s32 6, %v472
    %v474 = vrot.slane %v112, %v473
    %v491 = vunpack.c.l.b16 %v146
    %v492 = vunpack.c.l.b16 %v147
    %v493 = vunpack.c.l.b16 %v148
    %v494 = vunpack.c.l.b16 %v149
    %v495 = vunpack.c.l.b16 %v150
    %v496 = vunpack.c.l.b16 %v151
    %v497 = vunpack.c.l.b16 %v152
    %v498 = vunpack.c.l.b16 %v153
    %v499 = vunpack.c.l.b16 %v154
    %v500 = vunpack.c.l.b16 %v155
    %v501 = vunpack.c.l.b16 %v156
    %v502 = vunpack.c.l.b16 %v157
    %v503 = vunpack.c.l.b16 %v158
    %v504 = vunpack.c.l.b16 %v159
    %v505 = vunpack.c.l.b16 %v160
    %v506 = vunpack.c.l.b16 %v161
    %v507 = vpack.c.b16 %v492, %v491
    %v508 = vpack.c.b16 %v494, %v493
    %v509 = vpack.c.b16 %v496, %v495
    %v510 = vpack.c.b16 %v498, %v497
    %v511 = vpack.c.b16 %v500, %v499
    %v512 = vpack.c.b16 %v502, %v501
    %v513 = vpack.c.b16 %v504, %v503
    %v514 = vpack.c.b16 %v506, %v505
    %523 = vmatprep.subr.bf16.mxu0 0
    %524 = vmatpush1.bf16.msra.mxu0 %v514
    %525 = vmatprep.subr.bf16.mxu0 0
    %526 = vmatpush1.bf16.msra.mxu0 %v513
    %527 = vmatprep.subr.bf16.mxu0 0
    %528 = vmatpush1.bf16.msra.mxu0 %v512
    %529 = vmatprep.subr.bf16.mxu0 0
    %530 = vmatpush1.bf16.msra.mxu0 %v511
    %531 = vmatprep.subr.bf16.mxu0 0
    %532 = vmatpush1.bf16.msra.mxu0 %v510
    %533 = vmatprep.subr.bf16.mxu0 0
    %534 = vmatpush1.bf16.msra.mxu0 %v509
    %535 = vmatprep.subr.bf16.mxu0 0
    %536 = vmatpush1.bf16.msra.mxu0 %v508
    %537 = vmatprep.subr.bf16.mxu0 0
    %538 = vmatpush1.bf16.msra.mxu0 %v507
    %539 = vmatprep.subr.bf16.mxu0 0
    %540 = vmatpush2.bf16.msra.mxu0 0
    %541 = vmatprep.subr.bf16.mxu0 0
    %542 = vmatpush2.bf16.msra.mxu0 0
    %543 = vmatprep.subr.bf16.mxu0 0
    %544 = vmatpush2.bf16.msra.mxu0 0
    %545 = vmatprep.subr.bf16.mxu0 0
    %546 = vmatpush2.bf16.msra.mxu0 0
    %547 = vmatprep.subr.bf16.mxu0 0
    %548 = vmatpush2.bf16.msra.mxu0 0
    %549 = vmatprep.subr.bf16.mxu0 0
    %550 = vmatpush2.bf16.msra.mxu0 0
    %551 = vmatprep.subr.bf16.mxu0 0
    %552 = vmatpush2.bf16.msra.mxu0 0
    %553 = vmatprep.subr.bf16.mxu0 0
    %554 = vmatpush2.bf16.msra.mxu0 0
    %555 = vmatprep.mubr.bf16.mxu0 0
    %556 = vmatmul.mubr.bf16.gmra.mxu0 %v470
    %v557 = vpop.f32.mrf.mxu0
    %v558 = vadd.f32 %v474, %v557
    %v559 = vpop.f32.mrf.mxu0
    %v560 = vpop.f32.mrf.mxu0
    %v561 = vadd.f32 %v474, %v560
    %v562 = vpop.f32.mrf.mxu0
    %563 = vdwg.mxu0
    %564 = vadd.xlane.f32.xlu0 %v558
    %v565 = vpop.xlane.xlu0 %564
    %566 = vadd.xlane.f32.xlu0 %v561
    %v567 = vpop.xlane.xlu0 %566
    %v568 = vmul.f32 %v565, 0.03125
    %v569 = vmul.f32 %v567, 0.03125
    %v570 = vsub.f32 %v558, %v568
    %v571 = vsub.f32 %v561, %v569
    %v572 = vmul.f32 %v570, %v570
    %v573 = vmul.f32 %v571, %v571
    %574 = vadd.xlane.f32.xlu0 %v572
    %v575 = vpop.xlane.xlu0 %574
    %576 = vadd.xlane.f32.xlu0 %v573
    %v577 = vpop.xlane.xlu0 %576
    %v578 = vmul.f32 %v568, %v568
    %v579 = vmul.f32 %v569, %v569
    %v580 = vmul.f32 %v578, 96.0
    %v581 = vmul.f32 %v579, 96.0
    %v582 = vsub.f32 %v575, %v580
    %v583 = vsub.f32 %v577, %v581
    %v584 = vmul.f32 %v582, 0.03125
    %v585 = vmul.f32 %v583, 0.03125
    %v586 = vadd.f32 %v584, 1e-05
    %v587 = vadd.f32 %v585, 1e-05
    %v588 = vrsqrt.pop %v586
    %v589 = vrsqrt.pop %v587
    %v590 = vmul.f32 %v570, %v588
    %v591 = vmul.f32 %v571, %v589
    %v592 = vlaneseq
    %v593 = vshrl.u32 %v592, 7
    %v594 = vsub.s32 7, %v593
    %v595 = vrot.slane %v112, %v594
    %v596 = vmul.f32 %v590, %v595
    %v597 = vmul.f32 %v591, %v595
    %v598 = vlaneseq
    %v599 = vshrl.u32 %v598, 7
    %v600 = vsub.s32 0, %v599
    %v601 = vrot.slane %v113, %v600
    %v602 = vadd.f32 %v596, %v601
    %v603 = vadd.f32 %v597, %v601
    %vm604 = vcmp.ge.f32.partialorder %v602, 0.0
    %vm605 = vcmp.ge.f32.partialorder %v603, 0.0
    %v606 = vstv %s180
    %v607 = vmul.f32 %v606, %v602
    %v608 = vmul.f32 %v606, %v603
    %v609 = vsel %vm604, %v602, %v607
    %v610 = vsel %vm605, %v603, %v608
    %v611 = vlaneseq
    %v612 = vshrl.u32 %v611, 7
    %v613 = vsub.s32 1, %v612
    %v614 = vrot.slane %v113, %v613
    %v631 = vunpack.c.l.b16 %v162
    %v632 = vunpack.c.l.b16 %v163
    %v633 = vunpack.c.l.b16 %v164
    %v634 = vunpack.c.l.b16 %v165
    %v635 = vunpack.c.l.b16 %v166
    %v636 = vunpack.c.l.b16 %v167
    %v637 = vunpack.c.l.b16 %v168
    %v638 = vunpack.c.l.b16 %v169
    %v639 = vunpack.c.l.b16 %v170
    %v640 = vunpack.c.l.b16 %v171
    %v641 = vunpack.c.l.b16 %v172
    %v642 = vunpack.c.l.b16 %v173
    %v643 = vunpack.c.l.b16 %v174
    %v644 = vunpack.c.l.b16 %v175
    %v645 = vunpack.c.l.b16 %v176
    %v646 = vunpack.c.l.b16 %v177
    %v647 = vpack.c.b16 %v632, %v631
    %v648 = vpack.c.b16 %v634, %v633
    %v649 = vpack.c.b16 %v636, %v635
    %v650 = vpack.c.b16 %v638, %v637
    %v651 = vpack.c.b16 %v640, %v639
    %v652 = vpack.c.b16 %v642, %v641
    %v653 = vpack.c.b16 %v644, %v643
    %v654 = vpack.c.b16 %v646, %v645
    %663 = vmatprep.subr.bf16.mxu0 0
    %664 = vmatpush1.bf16.msra.mxu0 %v654
    %665 = vmatprep.subr.bf16.mxu0 0
    %666 = vmatpush1.bf16.msra.mxu0 %v653
    %667 = vmatprep.subr.bf16.mxu0 0
    %668 = vmatpush1.bf16.msra.mxu0 %v652
    %669 = vmatprep.subr.bf16.mxu0 0
    %670 = vmatpush1.bf16.msra.mxu0 %v651
    %671 = vmatprep.subr.bf16.mxu0 0
    %672 = vmatpush1.bf16.msra.mxu0 %v650
    %673 = vmatprep.subr.bf16.mxu0 0
    %674 = vmatpush1.bf16.msra.mxu0 %v649
    %675 = vmatprep.subr.bf16.mxu0 0
    %676 = vmatpush1.bf16.msra.mxu0 %v648
    %677 = vmatprep.subr.bf16.mxu0 0
    %678 = vmatpush1.bf16.msra.mxu0 %v647
    %679 = vmatprep.subr.bf16.mxu0 0
    %680 = vmatpush2.bf16.msra.mxu0 0
    %681 = vmatprep.subr.bf16.mxu0 0
    %682 = vmatpush2.bf16.msra.mxu0 0
    %683 = vmatprep.subr.bf16.mxu0 0
    %684 = vmatpush2.bf16.msra.mxu0 0
    %685 = vmatprep.subr.bf16.mxu0 0
    %686 = vmatpush2.bf16.msra.mxu0 0
    %687 = vmatprep.subr.bf16.mxu0 0
    %688 = vmatpush2.bf16.msra.mxu0 0
    %689 = vmatprep.subr.bf16.mxu0 0
    %690 = vmatpush2.bf16.msra.mxu0 0
    %691 = vmatprep.subr.bf16.mxu0 0
    %692 = vmatpush2.bf16.msra.mxu0 0
    %693 = vmatprep.subr.bf16.mxu0 0
    %694 = vmatpush2.bf16.msra.mxu0 0
    %695 = vmatprep.mubr.bf16.mxu0 0
    %696 = vmatmul.mubr.bf16.gmra.mxu0 %v191
    %v697 = vpop.f32.mrf.mxu0
    %v698 = vadd.f32 %v614, %v697
    %v699 = vpop.f32.mrf.mxu0
    %v700 = vpop.f32.mrf.mxu0
    %v701 = vadd.f32 %v614, %v700
    %v702 = vpop.f32.mrf.mxu0
    %703 = vdwg.mxu0
    %v704 = vadd.f32 %v609, %v698
    %v705 = vadd.f32 %v610, %v701
    %706 = vst [vmem:[#allocation15] sm:$0xff] %v704
    %707 = vst [vmem:[#allocation15 + $0x8] sm:$0xff] %v705
    // Predicated region
    $region50: #{tpu_custom_call.1} parent=1 // pred_check
      _
    $region51: #{tpu_custom_call.1} parent=1 // pred_check_branch
      %709 = sbr.rel (0) target = $region53
    $region52: #{tpu_custom_call.1} parent=1 // pred_region
      %s711 = ssub.s32 256, 256
      %712 = vsyncadd [#allocation6], %s711
      %s713 = sshll.u32 [#allocation15], 4
      %s714 = int_to_ptr.vmem [resolvable:$true] %s713
      %719 = dma.vmem_to_hbm [thread:$0]  %s714, 256, %s7, [#allocation6], 128, 128, 8
    $region53: #{tpu_custom_call.1} parent=1 // pred_fallthru
      _
    // Predicated region
    $region54: #{tpu_custom_call.1} parent=1 // pred_check
      _
    $region55: #{tpu_custom_call.1} parent=1 // pred_check_branch
      %721 = sbr.rel (0) target = $region57
    $region56: #{tpu_custom_call.1} parent=1 // pred_region
      %722 = dma.done [#allocation6], 256
    $region57: #{tpu_custom_call.1} parent=1 // pred_fallthru
      _
    %723 = vsyncpa [#allocation5], 1
    %724 = vsyncpa [#allocation8], 1
    %725 = vsyncpa [#allocation11], 1
    %726 = vsyncpa [#allocation14], 1
    %727 = vsyncpa [#allocation6], 1

</llo_original>
